<compile_context>
chip_gen: v7x
topology: tpu7x:2x2x1
jax: 0.10.0
libtpu: 0.0.40
codegen_flags: <defaults>
</compile_context>

<pallas_src>
import jax
import jax.numpy as jnp
from jax.experimental import pallas as pl
from jax.experimental.pallas import tpu as pltpu


def _round_up(x, m):
    return (x + m - 1) // m * m


def painn_interaction_kernel(
    qmu_ref,      # [N_pad, 4F] f32  resident input [ q | mu0 | mu1 | mu2 ] (aliased to output)
    w_ref,        # [TP, 8F]   bf16  [ wq | wR*d0 | wR*d1 | wR*d2 | 0 | wmu | wmu | wmu ]
    idx_j_ref,    # [TP, 1]    i32   gather index (column layout)
    idx_i_ref,    # [1, TP]    i32   scatter index (row layout -> transposed one-hot)
    w1_ref,       # [F, F]     bf16
    b1_ref,       # [1, F]     f32
    w2_ref,       # [F, 3F]    bf16  (w2q|w2R|w2mu fused)
    b2_ref,       # [1, 3F]    f32
    out_ref,      # [N_pad, 4F] f32  accumulator (same block across the pair grid)
    xmu_ref,      # scratch [N_pad, 8F] bf16
):
    n_pad = out_ref.shape[0]
    f = w1_ref.shape[0]
    f4 = 4 * f
    tp = w_ref.shape[0]

    # ---- step 0: fused interatomic MLP (computed once), build atom slab, init output ----
    @pl.when(pl.program_id(0) == 0)
    def _init():
        qmu = qmu_ref[...]                                              # [N, 4F] f32
        q = qmu[:, :f]
        h = jnp.dot(q.astype(jnp.bfloat16), w1_ref[...],
                    preferred_element_type=jnp.float32) + b1_ref[...]
        h = h * jax.nn.sigmoid(h)                                       # SiLU in f32 (EUP)
        x = jnp.dot(h.astype(jnp.bfloat16), w2_ref[...],
                    preferred_element_type=jnp.float32) + b2_ref[...]   # [N, 3F]
        x_q = x[:, :f]
        x_r = x[:, f:2 * f]
        x_m = x[:, 2 * f:]
        z0 = x_m * qmu[:, f:2 * f]                                      # x_m * mu_c (per atom)
        z1 = x_m * qmu[:, 2 * f:3 * f]
        z2 = x_m * qmu[:, 3 * f:]
        zero = jnp.zeros_like(x_q)
        xmu_ref[...] = jnp.concatenate(
            [x_q, x_r, x_r, x_r, zero, z0, z1, z2], axis=-1).astype(jnp.bfloat16)
        out_ref[...] = qmu                                              # residual base

    # ---- one-hot gather / scatter matrices, built in MXU-friendly orientations ----
    gj = (jax.lax.broadcasted_iota(jnp.int32, (tp, n_pad), 1)
          == idx_j_ref[...]).astype(jnp.bfloat16)                       # [TP, N]
    git = (jax.lax.broadcasted_iota(jnp.int32, (n_pad, tp), 0)
           == idx_i_ref[...]).astype(jnp.bfloat16)                      # [N, TP] (no XLU transpose)

    # ---- single fused gather of the 8F atom slab for the j atoms ----
    g = jnp.dot(gj, xmu_ref[...], preferred_element_type=jnp.float32)   # [TP, 8F]

    # ---- per-pair filter math: two lane-dense 4F (=128-lane) FMA slabs ----
    w = w_ref[...].astype(jnp.float32)                                  # [TP, 8F]
    pair_out = (w[:, :f4] * g[:, :f4]
                + w[:, f4:] * g[:, f4:]).astype(jnp.bfloat16)           # [TP, 4F] = [dq|dmu0|dmu1|dmu2]

    # ---- single fused lane-dense scatter-add into the resident [N, 4F] output ----
    out_ref[...] += jnp.dot(git, pair_out, preferred_element_type=jnp.float32)


def painn_interaction(q, mu, W_ij, dir_ij, pairlist, params, *, pair_tile=512):
    """q: [N,1,F], mu: [N,3,F], W_ij: [P,3F], dir_ij: [P,3], pairlist: [2,P] int."""
    N, _, F = q.shape
    P = pairlist.shape[1]
    F3, F4, F8 = 3 * F, 4 * F, 8 * F

    # Atom padding to 128: unmasked lanes for the one-hot build / MXU contraction dim.
    N_pad = _round_up(N, 128)
    # Pair tile must be a multiple of 128 (sublane dim of pair tiles, contraction dim of scatter).
    TP = min(_round_up(max(pair_tile, 128), 128), _round_up(P, 128))
    P_pad = _round_up(P, TP)
    n_tiles = P_pad // TP

    # ---- resident lane-dense atom slab [N_pad, 4F] = [ q | mu0 | mu1 | mu2 ] ----
    q2 = q[:, 0, :].astype(jnp.float32)
    mu_flat = mu.astype(jnp.float32).reshape(N, F3)
    qmu = jnp.pad(jnp.concatenate([q2, mu_flat], axis=-1), ((0, N_pad - N), (0, 0)))

    # ---- pair filter slab (dir_ij folded in), bf16 in HBM: [P_pad, 8F] ----
    W = W_ij.astype(jnp.float32)
    wq, wR, wmu = W[:, :F], W[:, F:2 * F], W[:, 2 * F:]
    d = dir_ij.astype(jnp.float32)
    w_slab = jnp.concatenate(
        [wq, wR * d[:, 0:1], wR * d[:, 1:2], wR * d[:, 2:3],
         jnp.zeros_like(wq), wmu, wmu, wmu], axis=-1).astype(jnp.bfloat16)
    w_slab = jnp.pad(w_slab, ((0, P_pad - P), (0, 0)))

    # Padded pairs use an out-of-range sentinel -> all-zero one-hot row/col -> no effect.
    sentinel = jnp.int32(N_pad)
    idx_i = jnp.full((P_pad,), sentinel, jnp.int32).at[:P].set(pairlist[0].astype(jnp.int32))
    idx_j = jnp.full((P_pad,), sentinel, jnp.int32).at[:P].set(pairlist[1].astype(jnp.int32))
    idx_j_col = idx_j[:, None]                                          # [P_pad, 1]
    idx_i_row = idx_i[None, :]                                          # [1, P_pad]

    # ---- fused MLP weights: bf16 MXU operands, f32 biases ----
    w1 = params['w1'].astype(jnp.bfloat16)
    b1 = params['b1'].astype(jnp.float32).reshape(1, F)
    w2 = jnp.concatenate([params['w2q'], params['w2R'], params['w2mu']],
                         axis=-1).astype(jnp.bfloat16)                  # [F, 3F]
    b2 = jnp.concatenate([params['b2q'], params['b2R'], params['b2mu']],
                         axis=-1).astype(jnp.float32).reshape(1, F3)    # [1, 3F]

    # ---- cost / VMEM hints ----
    flops = int(2 * N_pad * F * (F + F3)                                # fused MLP
                + 2 * P_pad * N_pad * F8                                # gather matmul
                + 2 * N_pad * P_pad * F4                                # scatter matmul
                + 3 * P_pad * F8)                                       # filter FMA (VPU)
    bytes_accessed = int(2 * N_pad * F4 * 4 + P_pad * F8 * 2 + 2 * P_pad * 4
                         + (F * F + F * F3) * 2 + (F + F3) * 4)
    vmem_est = int(2 * N_pad * F4 * 4 + N_pad * F8 * 2                  # qmu, out, xmu scratch
                   + 2 * (TP * F8 * 2 + TP * 128 * 4 + 8 * TP * 4)      # double-buffered tiles
                   + 2 * TP * N_pad * 2                                 # one-hots (bf16)
                   + 3 * TP * F8 * 4 + TP * F4 * 2)                     # pair temporaries
    vmem_limit = int(min(max(2 * vmem_est, 4 << 20), 48 << 20))         # <=48 MiB (v7x headroom)

    grid_spec = pltpu.PrefetchScalarGridSpec(
        num_scalar_prefetch=0,
        grid=(n_tiles,),
        in_specs=[
            pl.BlockSpec((N_pad, F4), lambda p: (0, 0)),    # qmu (resident, aliased to output)
            pl.BlockSpec((TP, F8), lambda p: (p, 0)),       # pair filter slab (bf16)
            pl.BlockSpec((TP, 1), lambda p: (p, 0)),        # idx_j (gather)
            pl.BlockSpec((1, TP), lambda p: (0, p)),        # idx_i (scatter, transposed)
            pl.BlockSpec((F, F), lambda p: (0, 0)),         # w1
            pl.BlockSpec((1, F), lambda p: (0, 0)),         # b1
            pl.BlockSpec((F, F3), lambda p: (0, 0)),        # w2 (fused)
            pl.BlockSpec((1, F3), lambda p: (0, 0)),        # b2 (fused)
        ],
        out_specs=pl.BlockSpec((N_pad, F4), lambda p: (0, 0)),
        scratch_shapes=[pltpu.VMEM((N_pad, F8), jnp.bfloat16)],
    )

    out = pl.pallas_call(
        painn_interaction_kernel,
        out_shape=jax.ShapeDtypeStruct((N_pad, F4), jnp.float32),
        grid_spec=grid_spec,
        input_output_aliases={0: 0},                        # reuse the qmu HBM buffer for out
        compiler_params=pltpu.CompilerParams(
            dimension_semantics=("arbitrary",),             # pair axis is a reduction
            vmem_limit_bytes=vmem_limit),
        cost_estimate=pl.CostEstimate(
            flops=flops, transcendentals=int(N_pad * F),
            bytes_accessed=bytes_accessed),
    )(qmu, w_slab, idx_j_col, idx_i_row, w1, b1, w2, b2)

    # back to PyTorch layouts: q [N,1,F], mu [N,3,F]
    q_out = out[:N, :F][:, None, :]
    mu_out = out[:N, F:].reshape(N, 3, F)
    return q_out, mu_out


def painn_interaction_reference(q, mu, W_ij, dir_ij, pairlist, params):
    """Pure-JAX f32 reference reproducing the PyTorch forward exactly."""
    idx_i, idx_j = pairlist[0], pairlist[1]
    N = q.shape[0]
    w2 = jnp.concatenate([params['w2q'], params['w2R'], params['w2mu']], axis=-1)
    b2 = jnp.concatenate([params['b2q'], params['b2R'], params['b2mu']], axis=-1)
    h = jax.nn.silu(q[:, 0, :] @ params['w1'] + params['b1'])
    x = h @ w2 + b2                                                     # [N, 3F]
    x_j = x[idx_j]                                                      # [P, 3F]
    xp = W_ij * x_j
    dq_pair, dmuR, dmumu = jnp.split(xp, 3, axis=-1)
    dq_atom = jax.ops.segment_sum(dq_pair, idx_i, num_segments=N)
    q_out = q + dq_atom[:, None, :]
    mu_j = mu[idx_j]                                                    # [P, 3, F]
    dmu_pair = dmuR[:, None, :] * dir_ij[:, :, None] + dmumu[:, None, :] * mu_j
    dmu_atom = jax.ops.segment_sum(dmu_pair, idx_i, num_segments=N)
    mu_out = mu + dmu_atom
    return q_out, mu_out


if __name__ == "__main__":
    N, F, P = 8, 32, 16   # atoms, nr_atom_basis, pairs

    key = jax.random.PRNGKey(0)
    keys = jax.random.split(key, 12)

    q = jax.random.normal(keys[0], (N, 1, F), dtype=jnp.float32)
    mu = jax.random.normal(keys[1], (N, 3, F), dtype=jnp.float32)
    W_ij = jax.random.normal(keys[2], (P, 3 * F), dtype=jnp.float32)
    dvec = jax.random.normal(keys[3], (P, 3), dtype=jnp.float32)
    dir_ij = dvec / jnp.linalg.norm(dvec, axis=-1, keepdims=True)
    idx_i = jax.random.randint(keys[4], (P,), 0, N, dtype=jnp.int32)
    idx_j = jax.random.randint(keys[5], (P,), 0, N, dtype=jnp.int32)
    pairlist = jnp.stack([idx_i, idx_j], axis=0)                        # [2, P]

    # Deterministic synthetic parameters (interatomic_net: Dense(F,F)+SiLU, Dense(F,3F)).
    s1 = 1.0 / jnp.sqrt(jnp.float32(F))
    params = {
        'w1':   s1 * jax.random.normal(keys[6], (F, F), dtype=jnp.float32),
        'b1':   0.1 * jax.random.normal(keys[7], (1, F), dtype=jnp.float32),
        'w2q':  s1 * jax.random.normal(keys[8], (F, F), dtype=jnp.float32),
        'w2R':  s1 * jax.random.normal(keys[9], (F, F), dtype=jnp.float32),
        'w2mu': s1 * jax.random.normal(keys[10], (F, F), dtype=jnp.float32),
        'b2q':  0.1 * jax.random.normal(keys[11], (1, F), dtype=jnp.float32),
        'b2R':  jnp.zeros((1, F), dtype=jnp.float32),
        'b2mu': jnp.zeros((1, F), dtype=jnp.float32),
    }

    painn_jit = jax.jit(painn_interaction)
    q_out, mu_out = painn_jit(q, mu, W_ij, dir_ij, pairlist, params)
    q_out = jax.block_until_ready(q_out)
    mu_out = jax.block_until_ready(mu_out)

    q_expect, mu_expect = painn_interaction_reference(q, mu, W_ij, dir_ij, pairlist, params)

    assert q_out.shape == (N, 1, F) and mu_out.shape == (N, 3, F)
    # bf16 MXU operands with f32 accumulation -> tolerance loosened vs pure f32.
    assert jnp.allclose(q_out, q_expect, rtol=5e-2, atol=1e-1)
    assert jnp.allclose(mu_out, mu_expect, rtol=5e-2, atol=1e-1)

    print("KERNEL_OK")
</pallas_src>

<mosaic_0001>
module attributes {stable_mosaic.version = 11 : i64} {
  func.func @painn_interaction_kernel(%arg0: i32, %arg1: memref<128x128xf32, #tpu.memory_space<vmem>>, %arg2: memref<128x256xbf16, #tpu.memory_space<vmem>>, %arg3: memref<128x1xi32, #tpu.memory_space<vmem>>, %arg4: memref<1x128xi32, #tpu.memory_space<vmem>>, %arg5: memref<32x32xbf16, #tpu.memory_space<vmem>>, %arg6: memref<1x32xf32, #tpu.memory_space<vmem>>, %arg7: memref<32x96xbf16, #tpu.memory_space<vmem>>, %arg8: memref<1x96xf32, #tpu.memory_space<vmem>>, %arg9: memref<128x128xf32, #tpu.memory_space<vmem>>, %arg10: memref<128x256xbf16, #tpu.memory_space<vmem>>) attributes {dimension_semantics = [#tpu.dimension_semantics<arbitrary>], iteration_bounds = array<i64: 1>, scalar_prefetch = 0 : i64, scratch_operands = 1 : i64, tpu.core_type = #tpu.core_type<tc>, window_params = [{pipeline_mode = #tpu.pipeline_mode<synchronous>, transform_indices = @transform_0, window_bounds = array<i64: 128, 128>}, {transform_indices = @transform_1, window_bounds = array<i64: 128, 256>}, {transform_indices = @transform_2, window_bounds = array<i64: 128, 1>}, {transform_indices = @transform_3, window_bounds = array<i64: 1, 128>}, {pipeline_mode = #tpu.pipeline_mode<synchronous>, transform_indices = @transform_4, window_bounds = array<i64: 32, 32>}, {pipeline_mode = #tpu.pipeline_mode<synchronous>, transform_indices = @transform_5, window_bounds = array<i64: 1, 32>}, {pipeline_mode = #tpu.pipeline_mode<synchronous>, transform_indices = @transform_6, window_bounds = array<i64: 32, 96>}, {pipeline_mode = #tpu.pipeline_mode<synchronous>, transform_indices = @transform_7, window_bounds = array<i64: 1, 96>}, {pipeline_mode = #tpu.pipeline_mode<synchronous>, transform_indices = @transform_8, window_bounds = array<i64: 128, 128>}]} {
    %c0_i32 = arith.constant 0 : i32
    %0 = arith.cmpi eq, %arg0, %c0_i32 : i32
    %1 = arith.extui %0 : i1 to i32
    %c0_i32_0 = arith.constant 0 : i32
    %2 = arith.cmpi ne, %1, %c0_i32_0 : i32
    scf.if %2 {
      %c0_13 = arith.constant 0 : index
      %c0_14 = arith.constant 0 : index
      %33 = vector.load %arg1[%c0_13, %c0_14] : memref<128x128xf32, #tpu.memory_space<vmem>>, vector<128x128xf32>
      %34 = vector.extract_strided_slice %33 {offsets = [0, 0], sizes = [128, 32], strides = [1, 1]} : vector<128x128xf32> to vector<128x32xf32>
      %35 = arith.truncf %34 : vector<128x32xf32> to vector<128x32xbf16>
      %c0_15 = arith.constant 0 : index
      %c0_16 = arith.constant 0 : index
      %36 = vector.load %arg5[%c0_15, %c0_16] : memref<32x32xbf16, #tpu.memory_space<vmem>>, vector<32x32xbf16>
      %cst_17 = arith.constant dense<0.000000e+00> : vector<128x32xf32>
      %37 = tpu.matmul %35, %36, %cst_17 {dimension_numbers = #tpu.dot_dimension_numbers<[1], [0], [0], [1], [0, 0, 1, 1], [], []>} : vector<128x32xbf16>, vector<32x32xbf16>, vector<128x32xf32> -> vector<128x32xf32>
      %c0_18 = arith.constant 0 : index
      %c0_19 = arith.constant 0 : index
      %38 = vector.load %arg6[%c0_18, %c0_19] : memref<1x32xf32, #tpu.memory_space<vmem>>, vector<1x32xf32>
      %39 = vector.broadcast %38 : vector<1x32xf32> to vector<128x32xf32>
      %40 = arith.addf %37, %39 : vector<128x32xf32>
      %41 = arith.negf %40 : vector<128x32xf32>
      %42 = math.exp %41 : vector<128x32xf32>
      %cst_20 = arith.constant 1.000000e+00 : f32
      %43 = vector.broadcast %cst_20 : f32 to vector<128x32xf32>
      %44 = arith.addf %43, %42 : vector<128x32xf32>
      %45 = arith.divf %43, %44 : vector<128x32xf32>
      %46 = arith.mulf %40, %45 : vector<128x32xf32>
      %47 = arith.truncf %46 : vector<128x32xf32> to vector<128x32xbf16>
      %c0_21 = arith.constant 0 : index
      %c0_22 = arith.constant 0 : index
      %48 = vector.load %arg7[%c0_21, %c0_22] : memref<32x96xbf16, #tpu.memory_space<vmem>>, vector<32x96xbf16>
      %cst_23 = arith.constant dense<0.000000e+00> : vector<128x96xf32>
      %49 = tpu.matmul %47, %48, %cst_23 {dimension_numbers = #tpu.dot_dimension_numbers<[1], [0], [0], [1], [0, 0, 1, 1], [], []>} : vector<128x32xbf16>, vector<32x96xbf16>, vector<128x96xf32> -> vector<128x96xf32>
      %c0_24 = arith.constant 0 : index
      %c0_25 = arith.constant 0 : index
      %50 = vector.load %arg8[%c0_24, %c0_25] : memref<1x96xf32, #tpu.memory_space<vmem>>, vector<1x96xf32>
      %51 = vector.broadcast %50 : vector<1x96xf32> to vector<128x96xf32>
      %52 = arith.addf %49, %51 : vector<128x96xf32>
      %53 = vector.extract_strided_slice %52 {offsets = [0, 0], sizes = [128, 32], strides = [1, 1]} : vector<128x96xf32> to vector<128x32xf32>
      %54 = vector.extract_strided_slice %52 {offsets = [0, 32], sizes = [128, 32], strides = [1, 1]} : vector<128x96xf32> to vector<128x32xf32>
      %55 = vector.extract_strided_slice %52 {offsets = [0, 64], sizes = [128, 32], strides = [1, 1]} : vector<128x96xf32> to vector<128x32xf32>
      %56 = vector.extract_strided_slice %33 {offsets = [0, 32], sizes = [128, 32], strides = [1, 1]} : vector<128x128xf32> to vector<128x32xf32>
      %57 = arith.mulf %55, %56 : vector<128x32xf32>
      %58 = vector.extract_strided_slice %33 {offsets = [0, 64], sizes = [128, 32], strides = [1, 1]} : vector<128x128xf32> to vector<128x32xf32>
      %59 = arith.mulf %55, %58 : vector<128x32xf32>
      %60 = vector.extract_strided_slice %33 {offsets = [0, 96], sizes = [128, 32], strides = [1, 1]} : vector<128x128xf32> to vector<128x32xf32>
      %61 = arith.mulf %55, %60 : vector<128x32xf32>
      %cst_26 = arith.constant 0.000000e+00 : f32
      %62 = vector.broadcast %cst_26 : f32 to vector<128x32xf32>
      %63 = tpu.concatenate %53, %54, %54, %54, %62, %57, %59, %61 in 1 : vector<128x32xf32>, vector<128x32xf32>, vector<128x32xf32>, vector<128x32xf32>, vector<128x32xf32>, vector<128x32xf32>, vector<128x32xf32>, vector<128x32xf32> -> vector<128x256xf32>
      %64 = arith.truncf %63 : vector<128x256xf32> to vector<128x256xbf16>
      %c0_27 = arith.constant 0 : index
      %c0_28 = arith.constant 0 : index
      %65 = vector.load %arg10[%c0_27, %c0_28] : memref<128x256xbf16, #tpu.memory_space<vmem>>, vector<128x256xbf16>
      tpu.vector_store %arg10[%c0_27, %c0_28], %64 {strides = array<i32>} : memref<128x256xbf16, #tpu.memory_space<vmem>>, vector<128x256xbf16>,
      %c0_29 = arith.constant 0 : index
      %c0_30 = arith.constant 0 : index
      %66 = vector.load %arg9[%c0_29, %c0_30] : memref<128x128xf32, #tpu.memory_space<vmem>>, vector<128x128xf32>
      tpu.vector_store %arg9[%c0_29, %c0_30], %33 {strides = array<i32>} : memref<128x128xf32, #tpu.memory_space<vmem>>, vector<128x128xf32>,
    } else {
    }
    %3 = tpu.iota {dimensions = array<i32: 1>} : vector<128x128xi32>
    %c0 = arith.constant 0 : index
    %c0_1 = arith.constant 0 : index
    %4 = vector.load %arg3[%c0, %c0_1] : memref<128x1xi32, #tpu.memory_space<vmem>>, vector<128x1xi32>
    %5 = vector.broadcast %4 : vector<128x1xi32> to vector<128x128xi32>
    %6 = arith.cmpi eq, %3, %5 : vector<128x128xi32>
    %7 = arith.extui %6 : vector<128x128xi1> to vector<128x128xi32>
    %8 = arith.sitofp %7 : vector<128x128xi32> to vector<128x128xf32>
    %9 = arith.truncf %8 : vector<128x128xf32> to vector<128x128xbf16>
    %10 = tpu.iota {dimensions = array<i32: 0>} : vector<128x128xi32>
    %c0_2 = arith.constant 0 : index
    %c0_3 = arith.constant 0 : index
    %11 = vector.load %arg4[%c0_2, %c0_3] : memref<1x128xi32, #tpu.memory_space<vmem>>, vector<1x128xi32>
    %12 = vector.broadcast %11 : vector<1x128xi32> to vector<128x128xi32>
    %13 = arith.cmpi eq, %10, %12 : vector<128x128xi32>
    %14 = arith.extui %13 : vector<128x128xi1> to vector<128x128xi32>
    %15 = arith.sitofp %14 : vector<128x128xi32> to vector<128x128xf32>
    %16 = arith.truncf %15 : vector<128x128xf32> to vector<128x128xbf16>
    %c0_4 = arith.constant 0 : index
    %c0_5 = arith.constant 0 : index
    %17 = vector.load %arg10[%c0_4, %c0_5] : memref<128x256xbf16, #tpu.memory_space<vmem>>, vector<128x256xbf16>
    %cst = arith.constant dense<0.000000e+00> : vector<128x256xf32>
    %18 = tpu.matmul %9, %17, %cst {dimension_numbers = #tpu.dot_dimension_numbers<[1], [0], [0], [1], [0, 0, 1, 1], [], []>} : vector<128x128xbf16>, vector<128x256xbf16>, vector<128x256xf32> -> vector<128x256xf32>
    %c0_6 = arith.constant 0 : index
    %c0_7 = arith.constant 0 : index
    %19 = vector.load %arg2[%c0_6, %c0_7] : memref<128x256xbf16, #tpu.memory_space<vmem>>, vector<128x256xbf16>
    %20 = arith.extf %19 : vector<128x256xbf16> to vector<128x256xf32>
    %21 = vector.extract_strided_slice %20 {offsets = [0, 0], sizes = [128, 128], strides = [1, 1]} : vector<128x256xf32> to vector<128x128xf32>
    %22 = vector.extract_strided_slice %18 {offsets = [0, 0], sizes = [128, 128], strides = [1, 1]} : vector<128x256xf32> to vector<128x128xf32>
    %23 = arith.mulf %21, %22 : vector<128x128xf32>
    %24 = vector.extract_strided_slice %20 {offsets = [0, 128], sizes = [128, 128], strides = [1, 1]} : vector<128x256xf32> to vector<128x128xf32>
    %25 = vector.extract_strided_slice %18 {offsets = [0, 128], sizes = [128, 128], strides = [1, 1]} : vector<128x256xf32> to vector<128x128xf32>
    %26 = arith.mulf %24, %25 : vector<128x128xf32>
    %27 = arith.addf %23, %26 : vector<128x128xf32>
    %28 = arith.truncf %27 : vector<128x128xf32> to vector<128x128xbf16>
    %c0_8 = arith.constant 0 : index
    %c0_9 = arith.constant 0 : index
    %29 = vector.load %arg9[%c0_8, %c0_9] : memref<128x128xf32, #tpu.memory_space<vmem>>, vector<128x128xf32>
    %cst_10 = arith.constant dense<0.000000e+00> : vector<128x128xf32>
    %30 = tpu.matmul %16, %28, %cst_10 {dimension_numbers = #tpu.dot_dimension_numbers<[1], [0], [0], [1], [0, 0, 1, 1], [], []>} : vector<128x128xbf16>, vector<128x128xbf16>, vector<128x128xf32> -> vector<128x128xf32>
    %31 = arith.addf %29, %30 : vector<128x128xf32>
    %c0_11 = arith.constant 0 : index
    %c0_12 = arith.constant 0 : index
    %32 = vector.load %arg9[%c0_11, %c0_12] : memref<128x128xf32, #tpu.memory_space<vmem>>, vector<128x128xf32>
    tpu.vector_store %arg9[%c0_11, %c0_12], %31 {strides = array<i32>} : memref<128x128xf32, #tpu.memory_space<vmem>>, vector<128x128xf32>,
    return
  }
  func.func @transform_0(%arg0: i32) -> (i32, i32) {
    %c0_i32 = arith.constant 0 : i32
    %c0_i32_0 = arith.constant 0 : i32
    %c0_i32_1 = arith.constant 0 : i32
    return %c0_i32, %c0_i32_0 : i32, i32
  }
  func.func @transform_1(%arg0: i32) -> (i32, i32) {
    %c0_i32 = arith.constant 0 : i32
    %c0_i32_0 = arith.constant 0 : i32
    return %arg0, %c0_i32 : i32, i32
  }
  func.func @transform_2(%arg0: i32) -> (i32, i32) {
    %c0_i32 = arith.constant 0 : i32
    %c0_i32_0 = arith.constant 0 : i32
    return %arg0, %c0_i32 : i32, i32
  }
  func.func @transform_3(%arg0: i32) -> (i32, i32) {
    %c0_i32 = arith.constant 0 : i32
    %c0_i32_0 = arith.constant 0 : i32
    return %c0_i32, %arg0 : i32, i32
  }
  func.func @transform_4(%arg0: i32) -> (i32, i32) {
    %c0_i32 = arith.constant 0 : i32
    %c0_i32_0 = arith.constant 0 : i32
    %c0_i32_1 = arith.constant 0 : i32
    return %c0_i32, %c0_i32_0 : i32, i32
  }
  func.func @transform_5(%arg0: i32) -> (i32, i32) {
    %c0_i32 = arith.constant 0 : i32
    %c0_i32_0 = arith.constant 0 : i32
    %c0_i32_1 = arith.constant 0 : i32
    return %c0_i32, %c0_i32_0 : i32, i32
  }
  func.func @transform_6(%arg0: i32) -> (i32, i32) {
    %c0_i32 = arith.constant 0 : i32
    %c0_i32_0 = arith.constant 0 : i32
    %c0_i32_1 = arith.constant 0 : i32
    return %c0_i32, %c0_i32_0 : i32, i32
  }
  func.func @transform_7(%arg0: i32) -> (i32, i32) {
    %c0_i32 = arith.constant 0 : i32
    %c0_i32_0 = arith.constant 0 : i32
    %c0_i32_1 = arith.constant 0 : i32
    return %c0_i32, %c0_i32_0 : i32, i32
  }
  func.func @transform_8(%arg0: i32) -> (i32, i32) {
    %c0_i32 = arith.constant 0 : i32
    %c0_i32_0 = arith.constant 0 : i32
    %c0_i32_1 = arith.constant 0 : i32
    return %c0_i32, %c0_i32_0 : i32, i32
  }
}

</mosaic_0001>

<llo_original>
// kernel: painn_interaction.1
$region0: #{painn_interaction.1}
  #allocation0 [shape = 'u32[]', space=smem, size = 0x4, offset = 0x4, fixed_abs, tag = 'smem constant byte address 0x4 - core index']
  #allocation1 [shape = 'u32[144,128]{1,0:T(1,128)}', space=vmem, size = 0x12000, scoped, tag = 'internal scratch']
  #allocation2 [shape = 'bf16[128,256]{1,0:T(16,128)(2,1)}', space=vmem, size = 0x10000, scoped, tag = 'scratch operand']
  %s0 = inlined_call_operand.vmem [shape: f32[128,128], index: 0, kind: input, shape index: {}, may-alias: {0,8}]
  %s1 = inlined_call_operand.vmem [shape: bf16[128,256], index: 1, kind: input, shape index: {}]
  %s2 = inlined_call_operand.vmem [shape: s32[128,1], index: 2, kind: input, shape index: {}]
  %s3 = inlined_call_operand.vmem [shape: s32[1,128], index: 3, kind: input, shape index: {}]
  %s4 = inlined_call_operand.vmem [shape: bf16[32,32], index: 4, kind: input, shape index: {}]
  %s5 = inlined_call_operand.vmem [shape: f32[1,32], index: 5, kind: input, shape index: {}]
  %s6 = inlined_call_operand.vmem [shape: bf16[32,96], index: 6, kind: input, shape index: {}]
  %s7 = inlined_call_operand.vmem [shape: f32[1,96], index: 7, kind: input, shape index: {}]
  %s8 = inlined_call_operand.vmem [shape: f32[128,128], index: 8, kind: output, shape index: {}, may-alias: {0,8}]
  %s9 = sld [smem:[#allocation0]]
  $region46: #{painn_interaction.1} parent=0
    _
  %s11 = ssub.s32 1, %s9
  %s12 = scalar_select 0, %s11, %s9
  // Predicated region
  $region2: #{painn_interaction.1} parent=0 // pred_check
    _
  $region3: #{painn_interaction.1} parent=0 // pred_check_branch
    %14 = sbr.rel (0) target = $region5
  $region4: #{painn_interaction.1} parent=0 // pred_region
    _
  $region5: #{painn_interaction.1} parent=0 // pred_fallthru
    _
  // Predicated region
  $region6: #{painn_interaction.1} parent=0 // pred_check
    _
  $region7: #{painn_interaction.1} parent=0 // pred_check_branch
    %16 = sbr.rel (0) target = $region9
  $region8: #{painn_interaction.1} parent=0 // pred_region
    _
  $region9: #{painn_interaction.1} parent=0 // pred_fallthru
    _
  // Predicated region
  $region10: #{painn_interaction.1} parent=0 // pred_check
    _
  $region11: #{painn_interaction.1} parent=0 // pred_check_branch
    %18 = sbr.rel (0) target = $region13
  $region12: #{painn_interaction.1} parent=0 // pred_region
    _
  $region13: #{painn_interaction.1} parent=0 // pred_fallthru
    _
  // Predicated region
  $region14: #{painn_interaction.1} parent=0 // pred_check
    _
  $region15: #{painn_interaction.1} parent=0 // pred_check_branch
    %20 = sbr.rel (0) target = $region17
  $region16: #{painn_interaction.1} parent=0 // pred_region
    _
  $region17: #{painn_interaction.1} parent=0 // pred_fallthru
    _
  // Predicated region
  $region18: #{painn_interaction.1} parent=0 // pred_check
    _
  $region19: #{painn_interaction.1} parent=0 // pred_check_branch
    %22 = sbr.rel (0) target = $region21
  $region20: #{painn_interaction.1} parent=0 // pred_region
    _
  $region21: #{painn_interaction.1} parent=0 // pred_fallthru
    _
  // Predicated region
  $region22: #{painn_interaction.1} parent=0 // pred_check
    _
  $region23: #{painn_interaction.1} parent=0 // pred_check_branch
    %24 = sbr.rel (0) target = $region25
  $region24: #{painn_interaction.1} parent=0 // pred_region
    _
  $region25: #{painn_interaction.1} parent=0 // pred_fallthru
    _
  // Predicated region
  $region26: #{painn_interaction.1} parent=0 // pred_check
    _
  $region27: #{painn_interaction.1} parent=0 // pred_check_branch
    %26 = sbr.rel (0) target = $region29
  $region28: #{painn_interaction.1} parent=0 // pred_region
    _
  $region29: #{painn_interaction.1} parent=0 // pred_fallthru
    _
  // Predicated region
  $region30: #{painn_interaction.1} parent=0 // pred_check
    _
  $region31: #{painn_interaction.1} parent=0 // pred_check_branch
    %28 = sbr.rel (0) target = $region33
  $region32: #{painn_interaction.1} parent=0 // pred_region
    _
  $region33: #{painn_interaction.1} parent=0 // pred_fallthru
    _
  %p30 = scmp.eq.s32.totalorder 0, 0
  // Predicated region
  $region34: #{painn_interaction.1} parent=0 // pred_check
    %p31 = pneg %p30
  $region35: #{painn_interaction.1} parent=0 // pred_check_branch
    %33 = sbr.rel (%p31) target = $region37
  $region36: #{painn_interaction.1} parent=0 // pred_region
    %v34 = vld [vmem:[%s0] sm:$0xff]
    %v35 = vld [vmem:[%s0 + $0x8] sm:$0xff]
    %v36 = vld [vmem:[%s0 + $0x10] sm:$0xff]
    %v37 = vld [vmem:[%s0 + $0x18] sm:$0xff]
    %v38 = vld [vmem:[%s0 + $0x20] sm:$0xff]
    %v39 = vld [vmem:[%s0 + $0x28] sm:$0xff]
    %v40 = vld [vmem:[%s0 + $0x30] sm:$0xff]
    %v41 = vld [vmem:[%s0 + $0x38] sm:$0xff]
    %v42 = vld [vmem:[%s0 + $0x40] sm:$0xff]
    %v43 = vld [vmem:[%s0 + $0x48] sm:$0xff]
    %v44 = vld [vmem:[%s0 + $0x50] sm:$0xff]
    %v45 = vld [vmem:[%s0 + $0x58] sm:$0xff]
    %v46 = vld [vmem:[%s0 + $0x60] sm:$0xff]
    %v47 = vld [vmem:[%s0 + $0x68] sm:$0xff]
    %v48 = vld [vmem:[%s0 + $0x70] sm:$0xff]
    %v49 = vld [vmem:[%s0 + $0x78] sm:$0xff]
    %v50 = vpack.c.bf16 %v35, %v34
    %v51 = vpack.c.bf16 %v37, %v36
    %v52 = vpack.c.bf16 %v39, %v38
    %v53 = vpack.c.bf16 %v41, %v40
    %v54 = vpack.c.bf16 %v43, %v42
    %v55 = vpack.c.bf16 %v45, %v44
    %v56 = vpack.c.bf16 %v47, %v46
    %v57 = vpack.c.bf16 %v49, %v48
    %v58 = vld [vmem:[%s4] sm:$0xf]
    %v59 = vld [vmem:[%s4 + $0x4] sm:$0xf]
    %v60 = vld [vmem:[%s4 + $0x8] sm:$0xf]
    %v61 = vld [vmem:[%s4 + $0xc] sm:$0xf]
    %v62 = vld [vmem:[%s5] sm:$0x1]
    %v64 = vlaneseq
    %v65 = vshrl.u32 %v64, 7
    %v66 = vsub.s32 0, %v65
    %v67 = vrot.slane %v62, %v66
    %v73 = vunpack.c.l.b16 %v58
    %v74 = vunpack.c.l.b16 %v59
    %v75 = vunpack.c.l.b16 %v60
    %v76 = vunpack.c.l.b16 %v61
    %v77 = vpack.c.b16 %v74, %v73
    %v78 = vpack.c.b16 %v76, %v75
    %vm81 = vcmask 261120
    %v83 = vsel %vm81, %v50, 0
    %v86 = vsel %vm81, %v51, 0
    %v89 = vsel %vm81, %v52, 0
    %v92 = vsel %vm81, %v53, 0
    %v95 = vsel %vm81, %v54, 0
    %v98 = vsel %vm81, %v55, 0
    %v101 = vsel %vm81, %v56, 0
    %v104 = vsel %vm81, %v57, 0
    %106 = vmatprep.subr.bf16.mxu0 0
    %107 = vmatpush1.bf16.msra.mxu0 %v77
    %108 = vmatprep.subr.bf16.mxu0 0
    %109 = vmatpush1.bf16.msra.mxu0 %v78
    %110 = vmatprep.subr.bf16.mxu0 0
    %111 = vmatpush1.bf16.msra.mxu0 0
    %112 = vmatprep.subr.bf16.mxu0 0
    %113 = vmatpush1.bf16.msra.mxu0 0
    %114 = vmatprep.subr.bf16.mxu0 0
    %115 = vmatpush1.bf16.msra.mxu0 0
    %116 = vmatprep.subr.bf16.mxu0 0
    %117 = vmatpush1.bf16.msra.mxu0 0
    %118 = vmatprep.subr.bf16.mxu0 0
    %119 = vmatpush1.bf16.msra.mxu0 0
    %120 = vmatprep.subr.bf16.mxu0 0
    %121 = vmatpush1.bf16.msra.mxu0 0
    %122 = vmatprep.subr.bf16.mxu0 0
    %123 = vmatpush1.bf16.msra.mxu0 0
    %124 = vmatprep.subr.bf16.mxu0 0
    %125 = vmatpush1.bf16.msra.mxu0 0
    %126 = vmatprep.subr.bf16.mxu0 0
    %127 = vmatpush1.bf16.msra.mxu0 0
    %128 = vmatprep.subr.bf16.mxu0 0
    %129 = vmatpush1.bf16.msra.mxu0 0
    %130 = vmatprep.subr.bf16.mxu0 0
    %131 = vmatpush1.bf16.msra.mxu0 0
    %132 = vmatprep.subr.bf16.mxu0 0
    %133 = vmatpush1.bf16.msra.mxu0 0
    %134 = vmatprep.subr.bf16.mxu0 0
    %135 = vmatpush1.bf16.msra.mxu0 0
    %136 = vmatprep.subr.bf16.mxu0 0
    %137 = vmatpush1.bf16.msra.mxu0 0
    %138 = vmatprep.mubr.bf16.mxu0 0
    %139 = vmatmul.mubr.bf16.gmra.mrb[0].mxu0 %v83
    %v140 = vpop.f32.mrb[0].mxu0
    %v141 = vadd.f32 %v67, %v140
    %v142 = vpop.f32.mrb[0].mxu0
    %v143 = vpop.f32.mrb[0].mxu0
    %v144 = vadd.f32 %v67, %v143
    %v145 = vpop.f32.mrb[0].mxu0
    %146 = vmatprep.mubr.bf16.mxu0 0
    %147 = vmatmul.mubr.bf16.gmra.mrb[0].mxu0 %v86
    %v148 = vpop.f32.mrb[0].mxu0
    %v149 = vadd.f32 %v67, %v148
    %v150 = vpop.f32.mrb[0].mxu0
    %v151 = vpop.f32.mrb[0].mxu0
    %v152 = vadd.f32 %v67, %v151
    %v153 = vpop.f32.mrb[0].mxu0
    %154 = vmatprep.mubr.bf16.mxu0 0
    %155 = vmatmul.mubr.bf16.gmra.mrb[0].mxu0 %v89
    %v156 = vpop.f32.mrb[0].mxu0
    %v157 = vadd.f32 %v67, %v156
    %v158 = vpop.f32.mrb[0].mxu0
    %v159 = vpop.f32.mrb[0].mxu0
    %v160 = vadd.f32 %v67, %v159
    %v161 = vpop.f32.mrb[0].mxu0
    %162 = vmatprep.mubr.bf16.mxu0 0
    %163 = vmatmul.mubr.bf16.gmra.mrb[0].mxu0 %v92
    %v164 = vpop.f32.mrb[0].mxu0
    %v165 = vadd.f32 %v67, %v164
    %v166 = vpop.f32.mrb[0].mxu0
    %v167 = vpop.f32.mrb[0].mxu0
    %v168 = vadd.f32 %v67, %v167
    %v169 = vpop.f32.mrb[0].mxu0
    %170 = vmatprep.mubr.bf16.mxu0 0
    %171 = vmatmul.mubr.bf16.gmra.mrb[0].mxu0 %v95
    %v172 = vpop.f32.mrb[0].mxu0
    %v173 = vadd.f32 %v67, %v172
    %v174 = vpop.f32.mrb[0].mxu0
    %v175 = vpop.f32.mrb[0].mxu0
    %v176 = vadd.f32 %v67, %v175
    %v177 = vpop.f32.mrb[0].mxu0
    %178 = vmatprep.mubr.bf16.mxu0 0
    %179 = vmatmul.mubr.bf16.gmra.mrb[0].mxu0 %v98
    %v180 = vpop.f32.mrb[0].mxu0
    %v181 = vadd.f32 %v67, %v180
    %v182 = vpop.f32.mrb[0].mxu0
    %v183 = vpop.f32.mrb[0].mxu0
    %v184 = vadd.f32 %v67, %v183
    %v185 = vpop.f32.mrb[0].mxu0
    %186 = vmatprep.mubr.bf16.mxu0 0
    %187 = vmatmul.mubr.bf16.gmra.mrb[0].mxu0 %v101
    %v188 = vpop.f32.mrb[0].mxu0
    %v189 = vadd.f32 %v67, %v188
    %v190 = vpop.f32.mrb[0].mxu0
    %v191 = vpop.f32.mrb[0].mxu0
    %v192 = vadd.f32 %v67, %v191
    %v193 = vpop.f32.mrb[0].mxu0
    %194 = vmatprep.mubr.bf16.mxu0 0
    %195 = vmatmul.mubr.bf16.gmra.mrb[0].mxu0 %v104
    %v196 = vpop.f32.mrb[0].mxu0
    %v197 = vadd.f32 %v67, %v196
    %v198 = vpop.f32.mrb[0].mxu0
    %v199 = vpop.f32.mrb[0].mxu0
    %v200 = vadd.f32 %v67, %v199
    %v201 = vpop.f32.mrb[0].mxu0
    %202 = vdwg.mxu0
    %v203 = vxor.u32 %v141, 2147483648
    %v204 = vxor.u32 %v144, 2147483648
    %v205 = vxor.u32 %v149, 2147483648
    %v206 = vxor.u32 %v152, 2147483648
    %v207 = vxor.u32 %v157, 2147483648
    %v208 = vxor.u32 %v160, 2147483648
    %v209 = vxor.u32 %v165, 2147483648
    %v210 = vxor.u32 %v168, 2147483648
    %v211 = vxor.u32 %v173, 2147483648
    %v212 = vxor.u32 %v176, 2147483648
    %v213 = vxor.u32 %v181, 2147483648
    %v214 = vxor.u32 %v184, 2147483648
    %v215 = vxor.u32 %v189, 2147483648
    %v216 = vxor.u32 %v192, 2147483648
    %v217 = vxor.u32 %v197, 2147483648
    %v218 = vxor.u32 %v200, 2147483648
    %v219 = vmul.f32 %v203, 1.442695
    %v220 = vpow.pop %v219
    %v221 = vmul.f32 %v204, 1.442695
    %v222 = vpow.pop %v221
    %v223 = vmul.f32 %v205, 1.442695
    %v224 = vpow.pop %v223
    %v225 = vmul.f32 %v206, 1.442695
    %v226 = vpow.pop %v225
    %v227 = vmul.f32 %v207, 1.442695
    %v228 = vpow.pop %v227
    %v229 = vmul.f32 %v208, 1.442695
    %v230 = vpow.pop %v229
    %v231 = vmul.f32 %v209, 1.442695
    %v232 = vpow.pop %v231
    %v233 = vmul.f32 %v210, 1.442695
    %v234 = vpow.pop %v233
    %v235 = vmul.f32 %v211, 1.442695
    %v236 = vpow.pop %v235
    %v237 = vmul.f32 %v212, 1.442695
    %v238 = vpow.pop %v237
    %v239 = vmul.f32 %v213, 1.442695
    %v240 = vpow.pop %v239
    %v241 = vmul.f32 %v214, 1.442695
    %v242 = vpow.pop %v241
    %v243 = vmul.f32 %v215, 1.442695
    %v244 = vpow.pop %v243
    %v245 = vmul.f32 %v216, 1.442695
    %v246 = vpow.pop %v245
    %v247 = vmul.f32 %v217, 1.442695
    %v248 = vpow.pop %v247
    %v249 = vmul.f32 %v218, 1.442695
    %v250 = vpow.pop %v249
    %v251 = vadd.f32 %v220, 1.0
    %v252 = vadd.f32 %v222, 1.0
    %v253 = vadd.f32 %v224, 1.0
    %v254 = vadd.f32 %v226, 1.0
    %v255 = vadd.f32 %v228, 1.0
    %v256 = vadd.f32 %v230, 1.0
    %v257 = vadd.f32 %v232, 1.0
    %v258 = vadd.f32 %v234, 1.0
    %v259 = vadd.f32 %v236, 1.0
    %v260 = vadd.f32 %v238, 1.0
    %v261 = vadd.f32 %v240, 1.0
    %v262 = vadd.f32 %v242, 1.0
    %v263 = vadd.f32 %v244, 1.0
    %v264 = vadd.f32 %v246, 1.0
    %v265 = vadd.f32 %v248, 1.0
    %v266 = vadd.f32 %v250, 1.0
    %v267 = vrcp.pop %v251
    %v268 = vmul.f32 1.0, %v267
    %v269 = vrcp.pop %v252
    %v270 = vmul.f32 1.0, %v269
    %v271 = vrcp.pop %v253
    %v272 = vmul.f32 1.0, %v271
    %v273 = vrcp.pop %v254
    %v274 = vmul.f32 1.0, %v273
    %v275 = vrcp.pop %v255
    %v276 = vmul.f32 1.0, %v275
    %v277 = vrcp.pop %v256
    %v278 = vmul.f32 1.0, %v277
    %v279 = vrcp.pop %v257
    %v280 = vmul.f32 1.0, %v279
    %v281 = vrcp.pop %v258
    %v282 = vmul.f32 1.0, %v281
    %v283 = vrcp.pop %v259
    %v284 = vmul.f32 1.0, %v283
    %v285 = vrcp.pop %v260
    %v286 = vmul.f32 1.0, %v285
    %v287 = vrcp.pop %v261
    %v288 = vmul.f32 1.0, %v287
    %v289 = vrcp.pop %v262
    %v290 = vmul.f32 1.0, %v289
    %v291 = vrcp.pop %v263
    %v292 = vmul.f32 1.0, %v291
    %v293 = vrcp.pop %v264
    %v294 = vmul.f32 1.0, %v293
    %v295 = vrcp.pop %v265
    %v296 = vmul.f32 1.0, %v295
    %v297 = vrcp.pop %v266
    %v298 = vmul.f32 1.0, %v297
    %v299 = vmul.f32 %v141, %v268
    %v300 = vmul.f32 %v144, %v270
    %v301 = vmul.f32 %v149, %v272
    %v302 = vmul.f32 %v152, %v274
    %v303 = vmul.f32 %v157, %v276
    %v304 = vmul.f32 %v160, %v278
    %v305 = vmul.f32 %v165, %v280
    %v306 = vmul.f32 %v168, %v282
    %v307 = vmul.f32 %v173, %v284
    %v308 = vmul.f32 %v176, %v286
    %v309 = vmul.f32 %v181, %v288
    %v310 = vmul.f32 %v184, %v290
    %v311 = vmul.f32 %v189, %v292
    %v312 = vmul.f32 %v192, %v294
    %v313 = vmul.f32 %v197, %v296
    %v314 = vmul.f32 %v200, %v298
    %v315 = vpack.c.bf16 %v300, %v299
    %v316 = vpack.c.bf16 %v302, %v301
    %v317 = vpack.c.bf16 %v304, %v303
    %v318 = vpack.c.bf16 %v306, %v305
    %v319 = vpack.c.bf16 %v308, %v307
    %v320 = vpack.c.bf16 %v310, %v309
    %v321 = vpack.c.bf16 %v312, %v311
    %v322 = vpack.c.bf16 %v314, %v313
    %v323 = vld [vmem:[%s6] sm:$0xf]
    %v324 = vld [vmem:[%s6 + $0x4] sm:$0xf]
    %v325 = vld [vmem:[%s6 + $0x8] sm:$0xf]
    %v326 = vld [vmem:[%s6 + $0xc] sm:$0xf]
    %v327 = vld [vmem:[%s7] sm:$0x1]
    %v329 = vlaneseq
    %v330 = vshrl.u32 %v329, 7
    %v331 = vsub.s32 0, %v330
    %v332 = vrot.slane %v327, %v331
    %v338 = vunpack.c.l.b16 %v323
    %v339 = vunpack.c.l.b16 %v324
    %v340 = vunpack.c.l.b16 %v325
    %v341 = vunpack.c.l.b16 %v326
    %v342 = vpack.c.b16 %v339, %v338
    %v343 = vpack.c.b16 %v341, %v340
    %v347 = vsel %vm81, %v315, 0
    %v350 = vsel %vm81, %v316, 0
    %v353 = vsel %vm81, %v317, 0
    %v356 = vsel %vm81, %v318, 0
    %v359 = vsel %vm81, %v319, 0
    %v362 = vsel %vm81, %v320, 0
    %v365 = vsel %vm81, %v321, 0
    %v368 = vsel %vm81, %v322, 0
    %370 = vmatprep.subr.bf16.mxu0 0
    %371 = vmatpush1.bf16.msra.mxu0 %v342
    %372 = vmatprep.subr.bf16.mxu0 0
    %373 = vmatpush1.bf16.msra.mxu0 %v343
    %374 = vmatprep.subr.bf16.mxu0 0
    %375 = vmatpush1.bf16.msra.mxu0 0
    %376 = vmatprep.subr.bf16.mxu0 0
    %377 = vmatpush1.bf16.msra.mxu0 0
    %378 = vmatprep.subr.bf16.mxu0 0
    %379 = vmatpush1.bf16.msra.mxu0 0
    %380 = vmatprep.subr.bf16.mxu0 0
    %381 = vmatpush1.bf16.msra.mxu0 0
    %382 = vmatprep.subr.bf16.mxu0 0
    %383 = vmatpush1.bf16.msra.mxu0 0
    %384 = vmatprep.subr.bf16.mxu0 0
    %385 = vmatpush1.bf16.msra.mxu0 0
    %386 = vmatprep.subr.bf16.mxu0 0
    %387 = vmatpush1.bf16.msra.mxu0 0
    %388 = vmatprep.subr.bf16.mxu0 0
    %389 = vmatpush1.bf16.msra.mxu0 0
    %390 = vmatprep.subr.bf16.mxu0 0
    %391 = vmatpush1.bf16.msra.mxu0 0
    %392 = vmatprep.subr.bf16.mxu0 0
    %393 = vmatpush1.bf16.msra.mxu0 0
    %394 = vmatprep.subr.bf16.mxu0 0
    %395 = vmatpush1.bf16.msra.mxu0 0
    %396 = vmatprep.subr.bf16.mxu0 0
    %397 = vmatpush1.bf16.msra.mxu0 0
    %398 = vmatprep.subr.bf16.mxu0 0
    %399 = vmatpush1.bf16.msra.mxu0 0
    %400 = vmatprep.subr.bf16.mxu0 0
    %401 = vmatpush1.bf16.msra.mxu0 0
    %402 = vmatprep.mubr.bf16.mxu0 0
    %403 = vmatmul.mubr.bf16.gmra.mrb[0].mxu0 %v347
    %v404 = vpop.f32.mrb[0].mxu0
    %v405 = vadd.f32 %v332, %v404
    %v406 = vpop.f32.mrb[0].mxu0
    %v407 = vpop.f32.mrb[0].mxu0
    %v408 = vadd.f32 %v332, %v407
    %v409 = vpop.f32.mrb[0].mxu0
    %410 = vmatprep.mubr.bf16.mxu0 0
    %411 = vmatmul.mubr.bf16.gmra.mrb[0].mxu0 %v350
    %v412 = vpop.f32.mrb[0].mxu0
    %v413 = vadd.f32 %v332, %v412
    %v414 = vpop.f32.mrb[0].mxu0
    %v415 = vpop.f32.mrb[0].mxu0
    %v416 = vadd.f32 %v332, %v415
    %v417 = vpop.f32.mrb[0].mxu0
    %418 = vmatprep.mubr.bf16.mxu0 0
    %419 = vmatmul.mubr.bf16.gmra.mrb[0].mxu0 %v353
    %v420 = vpop.f32.mrb[0].mxu0
    %v421 = vadd.f32 %v332, %v420
    %v422 = vpop.f32.mrb[0].mxu0
    %v423 = vpop.f32.mrb[0].mxu0
    %v424 = vadd.f32 %v332, %v423
    %v425 = vpop.f32.mrb[0].mxu0
    %426 = vmatprep.mubr.bf16.mxu0 0
    %427 = vmatmul.mubr.bf16.gmra.mrb[0].mxu0 %v356
    %v428 = vpop.f32.mrb[0].mxu0
    %v429 = vadd.f32 %v332, %v428
    %v430 = vpop.f32.mrb[0].mxu0
    %v431 = vpop.f32.mrb[0].mxu0
    %v432 = vadd.f32 %v332, %v431
    %v433 = vpop.f32.mrb[0].mxu0
    %434 = vmatprep.mubr.bf16.mxu0 0
    %435 = vmatmul.mubr.bf16.gmra.mrb[0].mxu0 %v359
    %v436 = vpop.f32.mrb[0].mxu0
    %v437 = vadd.f32 %v332, %v436
    %v438 = vpop.f32.mrb[0].mxu0
    %v439 = vpop.f32.mrb[0].mxu0
    %v440 = vadd.f32 %v332, %v439
    %v441 = vpop.f32.mrb[0].mxu0
    %442 = vmatprep.mubr.bf16.mxu0 0
    %443 = vmatmul.mubr.bf16.gmra.mrb[0].mxu0 %v362
    %v444 = vpop.f32.mrb[0].mxu0
    %v445 = vadd.f32 %v332, %v444
    %v446 = vpop.f32.mrb[0].mxu0
    %v447 = vpop.f32.mrb[0].mxu0
    %v448 = vadd.f32 %v332, %v447
    %v449 = vpop.f32.mrb[0].mxu0
    %450 = vmatprep.mubr.bf16.mxu0 0
    %451 = vmatmul.mubr.bf16.gmra.mrb[0].mxu0 %v365
    %v452 = vpop.f32.mrb[0].mxu0
    %v453 = vadd.f32 %v332, %v452
    %v454 = vpop.f32.mrb[0].mxu0
    %v455 = vpop.f32.mrb[0].mxu0
    %v456 = vadd.f32 %v332, %v455
    %v457 = vpop.f32.mrb[0].mxu0
    %458 = vmatprep.mubr.bf16.mxu0 0
    %459 = vmatmul.mubr.bf16.gmra.mrb[0].mxu0 %v368
    %v460 = vpop.f32.mrb[0].mxu0
    %v461 = vadd.f32 %v332, %v460
    %v462 = vpop.f32.mrb[0].mxu0
    %v463 = vpop.f32.mrb[0].mxu0
    %v464 = vadd.f32 %v332, %v463
    %v465 = vpop.f32.mrb[0].mxu0
    %466 = vdwg.mxu0
    %483 = vrot.lane.b32.xlu0 %v34, 32
    %v484 = vpop.permute.xlu0 %483
    %485 = vrot.lane.b32.xlu0 %v35, 32
    %v486 = vpop.permute.xlu0 %485
    %487 = vrot.lane.b32.xlu0 %v36, 32
    %v488 = vpop.permute.xlu0 %487
    %489 = vrot.lane.b32.xlu0 %v37, 32
    %v490 = vpop.permute.xlu0 %489
    %491 = vrot.lane.b32.xlu0 %v38, 32
    %v492 = vpop.permute.xlu0 %491
    %493 = vrot.lane.b32.xlu0 %v39, 32
    %v494 = vpop.permute.xlu0 %493
    %495 = vrot.lane.b32.xlu0 %v40, 32
    %v496 = vpop.permute.xlu0 %495
    %497 = vrot.lane.b32.xlu0 %v41, 32
    %v498 = vpop.permute.xlu0 %497
    %499 = vrot.lane.b32.xlu0 %v42, 32
    %v500 = vpop.permute.xlu0 %499
    %501 = vrot.lane.b32.xlu0 %v43, 32
    %v502 = vpop.permute.xlu0 %501
    %503 = vrot.lane.b32.xlu0 %v44, 32
    %v504 = vpop.permute.xlu0 %503
    %505 = vrot.lane.b32.xlu0 %v45, 32
    %v506 = vpop.permute.xlu0 %505
    %507 = vrot.lane.b32.xlu0 %v46, 32
    %v508 = vpop.permute.xlu0 %507
    %509 = vrot.lane.b32.xlu0 %v47, 32
    %v510 = vpop.permute.xlu0 %509
    %511 = vrot.lane.b32.xlu0 %v48, 32
    %v512 = vpop.permute.xlu0 %511
    %513 = vrot.lane.b32.xlu0 %v49, 32
    %v514 = vpop.permute.xlu0 %513
    %v531 = vmul.f32 %v405, %v484
    %v532 = vmul.f32 %v408, %v486
    %v533 = vmul.f32 %v413, %v488
    %v534 = vmul.f32 %v416, %v490
    %v535 = vmul.f32 %v421, %v492
    %v536 = vmul.f32 %v424, %v494
    %v537 = vmul.f32 %v429, %v496
    %v538 = vmul.f32 %v432, %v498
    %v539 = vmul.f32 %v437, %v500
    %v540 = vmul.f32 %v440, %v502
    %v541 = vmul.f32 %v445, %v504
    %v542 = vmul.f32 %v448, %v506
    %v543 = vmul.f32 %v453, %v508
    %v544 = vmul.f32 %v456, %v510
    %v545 = vmul.f32 %v461, %v512
    %v546 = vmul.f32 %v464, %v514
    %v547 = vmul.f32 %v405, %v34
    %v548 = vmul.f32 %v408, %v35
    %v549 = vmul.f32 %v413, %v36
    %v550 = vmul.f32 %v416, %v37
    %v551 = vmul.f32 %v421, %v38
    %v552 = vmul.f32 %v424, %v39
    %v553 = vmul.f32 %v429, %v40
    %v554 = vmul.f32 %v432, %v41
    %v555 = vmul.f32 %v437, %v42
    %v556 = vmul.f32 %v440, %v43
    %v557 = vmul.f32 %v445, %v44
    %v558 = vmul.f32 %v448, %v45
    %v559 = vmul.f32 %v453, %v46
    %v560 = vmul.f32 %v456, %v47
    %v561 = vmul.f32 %v461, %v48
    %v562 = vmul.f32 %v464, %v49
    %563 = vrot.lane.b32.xlu0 %v34, 96
    %v564 = vpop.permute.xlu0 %563
    %565 = vrot.lane.b32.xlu0 %v35, 96
    %v566 = vpop.permute.xlu0 %565
    %567 = vrot.lane.b32.xlu0 %v36, 96
    %v568 = vpop.permute.xlu0 %567
    %569 = vrot.lane.b32.xlu0 %v37, 96
    %v570 = vpop.permute.xlu0 %569
    %571 = vrot.lane.b32.xlu0 %v38, 96
    %v572 = vpop.permute.xlu0 %571
    %573 = vrot.lane.b32.xlu0 %v39, 96
    %v574 = vpop.permute.xlu0 %573
    %575 = vrot.lane.b32.xlu0 %v40, 96
    %v576 = vpop.permute.xlu0 %575
    %577 = vrot.lane.b32.xlu0 %v41, 96
    %v578 = vpop.permute.xlu0 %577
    %579 = vrot.lane.b32.xlu0 %v42, 96
    %v580 = vpop.permute.xlu0 %579
    %581 = vrot.lane.b32.xlu0 %v43, 96
    %v582 = vpop.permute.xlu0 %581
    %583 = vrot.lane.b32.xlu0 %v44, 96
    %v584 = vpop.permute.xlu0 %583
    %585 = vrot.lane.b32.xlu0 %v45, 96
    %v586 = vpop.permute.xlu0 %585
    %587 = vrot.lane.b32.xlu0 %v46, 96
    %v588 = vpop.permute.xlu0 %587
    %589 = vrot.lane.b32.xlu0 %v47, 96
    %v590 = vpop.permute.xlu0 %589
    %591 = vrot.lane.b32.xlu0 %v48, 96
    %v592 = vpop.permute.xlu0 %591
    %593 = vrot.lane.b32.xlu0 %v49, 96
    %v594 = vpop.permute.xlu0 %593
    %v611 = vmul.f32 %v405, %v564
    %v612 = vmul.f32 %v408, %v566
    %v613 = vmul.f32 %v413, %v568
    %v614 = vmul.f32 %v416, %v570
    %v615 = vmul.f32 %v421, %v572
    %v616 = vmul.f32 %v424, %v574
    %v617 = vmul.f32 %v429, %v576
    %v618 = vmul.f32 %v432, %v578
    %v619 = vmul.f32 %v437, %v580
    %v620 = vmul.f32 %v440, %v582
    %v621 = vmul.f32 %v445, %v584
    %v622 = vmul.f32 %v448, %v586
    %v623 = vmul.f32 %v453, %v588
    %v624 = vmul.f32 %v456, %v590
    %v625 = vmul.f32 %v461, %v592
    %v626 = vmul.f32 %v464, %v594
    %643 = vrot.lane.b32.xlu0 %v405, 32
    %v644 = vpop.permute.xlu0 %643
    %645 = vrot.lane.b32.xlu0 %v408, 32
    %v646 = vpop.permute.xlu0 %645
    %647 = vrot.lane.b32.xlu0 %v413, 32
    %v648 = vpop.permute.xlu0 %647
    %649 = vrot.lane.b32.xlu0 %v416, 32
    %v650 = vpop.permute.xlu0 %649
    %651 = vrot.lane.b32.xlu0 %v421, 32
    %v652 = vpop.permute.xlu0 %651
    %653 = vrot.lane.b32.xlu0 %v424, 32
    %v654 = vpop.permute.xlu0 %653
    %655 = vrot.lane.b32.xlu0 %v429, 32
    %v656 = vpop.permute.xlu0 %655
    %657 = vrot.lane.b32.xlu0 %v432, 32
    %v658 = vpop.permute.xlu0 %657
    %659 = vrot.lane.b32.xlu0 %v437, 32
    %v660 = vpop.permute.xlu0 %659
    %661 = vrot.lane.b32.xlu0 %v440, 32
    %v662 = vpop.permute.xlu0 %661
    %663 = vrot.lane.b32.xlu0 %v445, 32
    %v664 = vpop.permute.xlu0 %663
    %665 = vrot.lane.b32.xlu0 %v448, 32
    %v666 = vpop.permute.xlu0 %665
    %667 = vrot.lane.b32.xlu0 %v453, 32
    %v668 = vpop.permute.xlu0 %667
    %669 = vrot.lane.b32.xlu0 %v456, 32
    %v670 = vpop.permute.xlu0 %669
    %671 = vrot.lane.b32.xlu0 %v461, 32
    %v672 = vpop.permute.xlu0 %671
    %673 = vrot.lane.b32.xlu0 %v464, 32
    %v674 = vpop.permute.xlu0 %673
    %691 = vrot.lane.b32.xlu0 %v405, 64
    %v692 = vpop.permute.xlu0 %691
    %693 = vrot.lane.b32.xlu0 %v408, 64
    %v694 = vpop.permute.xlu0 %693
    %695 = vrot.lane.b32.xlu0 %v413, 64
    %v696 = vpop.permute.xlu0 %695
    %697 = vrot.lane.b32.xlu0 %v416, 64
    %v698 = vpop.permute.xlu0 %697
    %699 = vrot.lane.b32.xlu0 %v421, 64
    %v700 = vpop.permute.xlu0 %699
    %701 = vrot.lane.b32.xlu0 %v424, 64
    %v702 = vpop.permute.xlu0 %701
    %703 = vrot.lane.b32.xlu0 %v429, 64
    %v704 = vpop.permute.xlu0 %703
    %705 = vrot.lane.b32.xlu0 %v432, 64
    %v706 = vpop.permute.xlu0 %705
    %707 = vrot.lane.b32.xlu0 %v437, 64
    %v708 = vpop.permute.xlu0 %707
    %709 = vrot.lane.b32.xlu0 %v440, 64
    %v710 = vpop.permute.xlu0 %709
    %711 = vrot.lane.b32.xlu0 %v445, 64
    %v712 = vpop.permute.xlu0 %711
    %713 = vrot.lane.b32.xlu0 %v448, 64
    %v714 = vpop.permute.xlu0 %713
    %715 = vrot.lane.b32.xlu0 %v453, 64
    %v716 = vpop.permute.xlu0 %715
    %717 = vrot.lane.b32.xlu0 %v456, 64
    %v718 = vpop.permute.xlu0 %717
    %719 = vrot.lane.b32.xlu0 %v461, 64
    %v720 = vpop.permute.xlu0 %719
    %721 = vrot.lane.b32.xlu0 %v464, 64
    %v722 = vpop.permute.xlu0 %721
    %755 = vrot.lane.b32.xlu0 %v531, 96
    %v756 = vpop.permute.xlu0 %755
    %757 = vrot.lane.b32.xlu0 %v532, 96
    %v758 = vpop.permute.xlu0 %757
    %759 = vrot.lane.b32.xlu0 %v533, 96
    %v760 = vpop.permute.xlu0 %759
    %761 = vrot.lane.b32.xlu0 %v534, 96
    %v762 = vpop.permute.xlu0 %761
    %763 = vrot.lane.b32.xlu0 %v535, 96
    %v764 = vpop.permute.xlu0 %763
    %765 = vrot.lane.b32.xlu0 %v536, 96
    %v766 = vpop.permute.xlu0 %765
    %767 = vrot.lane.b32.xlu0 %v537, 96
    %v768 = vpop.permute.xlu0 %767
    %769 = vrot.lane.b32.xlu0 %v538, 96
    %v770 = vpop.permute.xlu0 %769
    %771 = vrot.lane.b32.xlu0 %v539, 96
    %v772 = vpop.permute.xlu0 %771
    %773 = vrot.lane.b32.xlu0 %v540, 96
    %v774 = vpop.permute.xlu0 %773
    %775 = vrot.lane.b32.xlu0 %v541, 96
    %v776 = vpop.permute.xlu0 %775
    %777 = vrot.lane.b32.xlu0 %v542, 96
    %v778 = vpop.permute.xlu0 %777
    %779 = vrot.lane.b32.xlu0 %v543, 96
    %v780 = vpop.permute.xlu0 %779
    %781 = vrot.lane.b32.xlu0 %v544, 96
    %v782 = vpop.permute.xlu0 %781
    %783 = vrot.lane.b32.xlu0 %v545, 96
    %v784 = vpop.permute.xlu0 %783
    %785 = vrot.lane.b32.xlu0 %v546, 96
    %v786 = vpop.permute.xlu0 %785
    %819 = vrot.lane.b32.xlu0 %v611, 32
    %v820 = vpop.permute.xlu0 %819
    %821 = vrot.lane.b32.xlu0 %v612, 32
    %v822 = vpop.permute.xlu0 %821
    %823 = vrot.lane.b32.xlu0 %v613, 32
    %v824 = vpop.permute.xlu0 %823
    %825 = vrot.lane.b32.xlu0 %v614, 32
    %v826 = vpop.permute.xlu0 %825
    %827 = vrot.lane.b32.xlu0 %v615, 32
    %v828 = vpop.permute.xlu0 %827
    %829 = vrot.lane.b32.xlu0 %v616, 32
    %v830 = vpop.permute.xlu0 %829
    %831 = vrot.lane.b32.xlu0 %v617, 32
    %v832 = vpop.permute.xlu0 %831
    %833 = vrot.lane.b32.xlu0 %v618, 32
    %v834 = vpop.permute.xlu0 %833
    %835 = vrot.lane.b32.xlu0 %v619, 32
    %v836 = vpop.permute.xlu0 %835
    %837 = vrot.lane.b32.xlu0 %v620, 32
    %v838 = vpop.permute.xlu0 %837
    %839 = vrot.lane.b32.xlu0 %v621, 32
    %v840 = vpop.permute.xlu0 %839
    %841 = vrot.lane.b32.xlu0 %v622, 32
    %v842 = vpop.permute.xlu0 %841
    %843 = vrot.lane.b32.xlu0 %v623, 32
    %v844 = vpop.permute.xlu0 %843
    %845 = vrot.lane.b32.xlu0 %v624, 32
    %v846 = vpop.permute.xlu0 %845
    %847 = vrot.lane.b32.xlu0 %v625, 32
    %v848 = vpop.permute.xlu0 %847
    %849 = vrot.lane.b32.xlu0 %v626, 32
    %v850 = vpop.permute.xlu0 %849
    %vm867 = vcmask 523264
    %v868 = vsel %vm867, %v405, %v644
    %v869 = vsel %vm867, %v408, %v646
    %v870 = vsel %vm867, %v413, %v648
    %v871 = vsel %vm867, %v416, %v650
    %v872 = vsel %vm867, %v421, %v652
    %v873 = vsel %vm867, %v424, %v654
    %v874 = vsel %vm867, %v429, %v656
    %v875 = vsel %vm867, %v432, %v658
    %v876 = vsel %vm867, %v437, %v660
    %v877 = vsel %vm867, %v440, %v662
    %v878 = vsel %vm867, %v445, %v664
    %v879 = vsel %vm867, %v448, %v666
    %v880 = vsel %vm867, %v453, %v668
    %v881 = vsel %vm867, %v456, %v670
    %v882 = vsel %vm867, %v461, %v672
    %v883 = vsel %vm867, %v464, %v674
    %vm884 = vcmask 785408
    %v885 = vsel %vm884, %v868, %v692
    %v886 = vsel %vm884, %v869, %v694
    %v887 = vsel %vm884, %v870, %v696
    %v888 = vsel %vm884, %v871, %v698
    %v889 = vsel %vm884, %v872, %v700
    %v890 = vsel %vm884, %v873, %v702
    %v891 = vsel %vm884, %v874, %v704
    %v892 = vsel %vm884, %v875, %v706
    %v893 = vsel %vm884, %v876, %v708
    %v894 = vsel %vm884, %v877, %v710
    %v895 = vsel %vm884, %v878, %v712
    %v896 = vsel %vm884, %v879, %v714
    %v897 = vsel %vm884, %v880, %v716
    %v898 = vsel %vm884, %v881, %v718
    %v899 = vsel %vm884, %v882, %v720
    %v900 = vsel %vm884, %v883, %v722
    %v901 = vsel %vm81, 0.0, %v756
    %v902 = vsel %vm81, 0.0, %v758
    %v903 = vsel %vm81, 0.0, %v760
    %v904 = vsel %vm81, 0.0, %v762
    %v905 = vsel %vm81, 0.0, %v764
    %v906 = vsel %vm81, 0.0, %v766
    %v907 = vsel %vm81, 0.0, %v768
    %v908 = vsel %vm81, 0.0, %v770
    %v909 = vsel %vm81, 0.0, %v772
    %v910 = vsel %vm81, 0.0, %v774
    %v911 = vsel %vm81, 0.0, %v776
    %v912 = vsel %vm81, 0.0, %v778
    %v913 = vsel %vm81, 0.0, %v780
    %v914 = vsel %vm81, 0.0, %v782
    %v915 = vsel %vm81, 0.0, %v784
    %v916 = vsel %vm81, 0.0, %v786
    %v917 = vsel %vm867, %v901, %v547
    %v918 = vsel %vm867, %v902, %v548
    %v919 = vsel %vm867, %v903, %v549
    %v920 = vsel %vm867, %v904, %v550
    %v921 = vsel %vm867, %v905, %v551
    %v922 = vsel %vm867, %v906, %v552
    %v923 = vsel %vm867, %v907, %v553
    %v924 = vsel %vm867, %v908, %v554
    %v925 = vsel %vm867, %v909, %v555
    %v926 = vsel %vm867, %v910, %v556
    %v927 = vsel %vm867, %v911, %v557
    %v928 = vsel %vm867, %v912, %v558
    %v929 = vsel %vm867, %v913, %v559
    %v930 = vsel %vm867, %v914, %v560
    %v931 = vsel %vm867, %v915, %v561
    %v932 = vsel %vm867, %v916, %v562
    %v933 = vsel %vm884, %v917, %v820
    %v934 = vsel %vm884, %v918, %v822
    %v935 = vsel %vm884, %v919, %v824
    %v936 = vsel %vm884, %v920, %v826
    %v937 = vsel %vm884, %v921, %v828
    %v938 = vsel %vm884, %v922, %v830
    %v939 = vsel %vm884, %v923, %v832
    %v940 = vsel %vm884, %v924, %v834
    %v941 = vsel %vm884, %v925, %v836
    %v942 = vsel %vm884, %v926, %v838
    %v943 = vsel %vm884, %v927, %v840
    %v944 = vsel %vm884, %v928, %v842
    %v945 = vsel %vm884, %v929, %v844
    %v946 = vsel %vm884, %v930, %v846
    %v947 = vsel %vm884, %v931, %v848
    %v948 = vsel %vm884, %v932, %v850
    %v949 = vpack.c.bf16 %v886, %v885
    %v950 = vpack.c.bf16 %v934, %v933
    %v951 = vpack.c.bf16 %v888, %v887
    %v952 = vpack.c.bf16 %v936, %v935
    %v953 = vpack.c.bf16 %v890, %v889
    %v954 = vpack.c.bf16 %v938, %v937
    %v955 = vpack.c.bf16 %v892, %v891
    %v956 = vpack.c.bf16 %v940, %v939
    %v957 = vpack.c.bf16 %v894, %v893
    %v958 = vpack.c.bf16 %v942, %v941
    %v959 = vpack.c.bf16 %v896, %v895
    %v960 = vpack.c.bf16 %v944, %v943
    %v961 = vpack.c.bf16 %v898, %v897
    %v962 = vpack.c.bf16 %v946, %v945
    %v963 = vpack.c.bf16 %v900, %v899
    %v964 = vpack.c.bf16 %v948, %v947
    %965 = vst [vmem:[#allocation2] sm:$0xff] %v949
    %966 = vst [vmem:[#allocation2 + $0x8] sm:$0xff] %v950
    %967 = vst [vmem:[#allocation2 + $0x10] sm:$0xff] %v951
    %968 = vst [vmem:[#allocation2 + $0x18] sm:$0xff] %v952
    %969 = vst [vmem:[#allocation2 + $0x20] sm:$0xff] %v953
    %970 = vst [vmem:[#allocation2 + $0x28] sm:$0xff] %v954
    %971 = vst [vmem:[#allocation2 + $0x30] sm:$0xff] %v955
    %972 = vst [vmem:[#allocation2 + $0x38] sm:$0xff] %v956
    %973 = vst [vmem:[#allocation2 + $0x40] sm:$0xff] %v957
    %974 = vst [vmem:[#allocation2 + $0x48] sm:$0xff] %v958
    %975 = vst [vmem:[#allocation2 + $0x50] sm:$0xff] %v959
    %976 = vst [vmem:[#allocation2 + $0x58] sm:$0xff] %v960
    %977 = vst [vmem:[#allocation2 + $0x60] sm:$0xff] %v961
    %978 = vst [vmem:[#allocation2 + $0x68] sm:$0xff] %v962
    %979 = vst [vmem:[#allocation2 + $0x70] sm:$0xff] %v963
    %980 = vst [vmem:[#allocation2 + $0x78] sm:$0xff] %v964
    %981 = vst [vmem:[%s8] sm:$0xff] %v34
    %982 = vst [vmem:[%s8 + $0x8] sm:$0xff] %v35
    %983 = vst [vmem:[%s8 + $0x10] sm:$0xff] %v36
    %984 = vst [vmem:[%s8 + $0x18] sm:$0xff] %v37
    %985 = vst [vmem:[%s8 + $0x20] sm:$0xff] %v38
    %986 = vst [vmem:[%s8 + $0x28] sm:$0xff] %v39
    %987 = vst [vmem:[%s8 + $0x30] sm:$0xff] %v40
    %988 = vst [vmem:[%s8 + $0x38] sm:$0xff] %v41
    %989 = vst [vmem:[%s8 + $0x40] sm:$0xff] %v42
    %990 = vst [vmem:[%s8 + $0x48] sm:$0xff] %v43
    %991 = vst [vmem:[%s8 + $0x50] sm:$0xff] %v44
    %992 = vst [vmem:[%s8 + $0x58] sm:$0xff] %v45
    %993 = vst [vmem:[%s8 + $0x60] sm:$0xff] %v46
    %994 = vst [vmem:[%s8 + $0x68] sm:$0xff] %v47
    %995 = vst [vmem:[%s8 + $0x70] sm:$0xff] %v48
    %996 = vst [vmem:[%s8 + $0x78] sm:$0xff] %v49
  $region37: #{painn_interaction.1} parent=0 // pred_fallthru
    _
  %v997 = vlaneseq
  %v998 = vand.u32 %v997, 127
  %v999 = vld [vmem:[%s2] sm:$0xff]
  %v1000 = vld [vmem:[%s2 + $0x8] sm:$0xff]
  %v1001 = vld [vmem:[%s2 + $0x10] sm:$0xff]
  %v1002 = vld [vmem:[%s2 + $0x18] sm:$0xff]
  %v1003 = vld [vmem:[%s2 + $0x20] sm:$0xff]
  %v1004 = vld [vmem:[%s2 + $0x28] sm:$0xff]
  %v1005 = vld [vmem:[%s2 + $0x30] sm:$0xff]
  %v1006 = vld [vmem:[%s2 + $0x38] sm:$0xff]
  %v1007 = vld [vmem:[%s2 + $0x40] sm:$0xff]
  %v1008 = vld [vmem:[%s2 + $0x48] sm:$0xff]
  %v1009 = vld [vmem:[%s2 + $0x50] sm:$0xff]
  %v1010 = vld [vmem:[%s2 + $0x58] sm:$0xff]
  %v1011 = vld [vmem:[%s2 + $0x60] sm:$0xff]
  %v1012 = vld [vmem:[%s2 + $0x68] sm:$0xff]
  %v1013 = vld [vmem:[%s2 + $0x70] sm:$0xff]
  %v1014 = vld [vmem:[%s2 + $0x78] sm:$0xff]
  %1015 = vset.pattern.permute.xlu0 0
  %1016 = vperm.xlu0 %1015, %v999
  %v1017 = vpop.permute.xlu0 %1016
  %1018 = vset.pattern.permute.xlu0 0
  %1019 = vperm.xlu0 %1018, %v1000
  %v1020 = vpop.permute.xlu0 %1019
  %1021 = vset.pattern.permute.xlu0 0
  %1022 = vperm.xlu0 %1021, %v1001
  %v1023 = vpop.permute.xlu0 %1022
  %1024 = vset.pattern.permute.xlu0 0
  %1025 = vperm.xlu0 %1024, %v1002
  %v1026 = vpop.permute.xlu0 %1025
  %1027 = vset.pattern.permute.xlu0 0
  %1028 = vperm.xlu0 %1027, %v1003
  %v1029 = vpop.permute.xlu0 %1028
  %1030 = vset.pattern.permute.xlu0 0
  %1031 = vperm.xlu0 %1030, %v1004
  %v1032 = vpop.permute.xlu0 %1031
  %1033 = vset.pattern.permute.xlu0 0
  %1034 = vperm.xlu0 %1033, %v1005
  %v1035 = vpop.permute.xlu0 %1034
  %1036 = vset.pattern.permute.xlu0 0
  %1037 = vperm.xlu0 %1036, %v1006
  %v1038 = vpop.permute.xlu0 %1037
  %1039 = vset.pattern.permute.xlu0 0
  %1040 = vperm.xlu0 %1039, %v1007
  %v1041 = vpop.permute.xlu0 %1040
  %1042 = vset.pattern.permute.xlu0 0
  %1043 = vperm.xlu0 %1042, %v1008
  %v1044 = vpop.permute.xlu0 %1043
  %1045 = vset.pattern.permute.xlu0 0
  %1046 = vperm.xlu0 %1045, %v1009
  %v1047 = vpop.permute.xlu0 %1046
  %1048 = vset.pattern.permute.xlu0 0
  %1049 = vperm.xlu0 %1048, %v1010
  %v1050 = vpop.permute.xlu0 %1049
  %1051 = vset.pattern.permute.xlu0 0
  %1052 = vperm.xlu0 %1051, %v1011
  %v1053 = vpop.permute.xlu0 %1052
  %1054 = vset.pattern.permute.xlu0 0
  %1055 = vperm.xlu0 %1054, %v1012
  %v1056 = vpop.permute.xlu0 %1055
  %1057 = vset.pattern.permute.xlu0 0
  %1058 = vperm.xlu0 %1057, %v1013
  %v1059 = vpop.permute.xlu0 %1058
  %1060 = vset.pattern.permute.xlu0 0
  %1061 = vperm.xlu0 %1060, %v1014
  %v1062 = vpop.permute.xlu0 %1061
  %vm1063 = vcmp.eq.s32.totalorder %v998, %v1017
  %vm1064 = vcmp.eq.s32.totalorder %v998, %v1020
  %vm1065 = vcmp.eq.s32.totalorder %v998, %v1023
  %vm1066 = vcmp.eq.s32.totalorder %v998, %v1026
  %vm1067 = vcmp.eq.s32.totalorder %v998, %v1029
  %vm1068 = vcmp.eq.s32.totalorder %v998, %v1032
  %vm1069 = vcmp.eq.s32.totalorder %v998, %v1035
  %vm1070 = vcmp.eq.s32.totalorder %v998, %v1038
  %vm1071 = vcmp.eq.s32.totalorder %v998, %v1041
  %vm1072 = vcmp.eq.s32.totalorder %v998, %v1044
  %vm1073 = vcmp.eq.s32.totalorder %v998, %v1047
  %vm1074 = vcmp.eq.s32.totalorder %v998, %v1050
  %vm1075 = vcmp.eq.s32.totalorder %v998, %v1053
  %vm1076 = vcmp.eq.s32.totalorder %v998, %v1056
  %vm1077 = vcmp.eq.s32.totalorder %v998, %v1059
  %vm1078 = vcmp.eq.s32.totalorder %v998, %v1062
  %v1079 = vsel %vm1063, 1, 0
  %v1080 = vsel %vm1064, 1, 0
  %v1081 = vsel %vm1065, 1, 0
  %v1082 = vsel %vm1066, 1, 0
  %v1083 = vsel %vm1067, 1, 0
  %v1084 = vsel %vm1068, 1, 0
  %v1085 = vsel %vm1069, 1, 0
  %v1086 = vsel %vm1070, 1, 0
  %v1087 = vsel %vm1071, 1, 0
  %v1088 = vsel %vm1072, 1, 0
  %v1089 = vsel %vm1073, 1, 0
  %v1090 = vsel %vm1074, 1, 0
  %v1091 = vsel %vm1075, 1, 0
  %v1092 = vsel %vm1076, 1, 0
  %v1093 = vsel %vm1077, 1, 0
  %v1094 = vsel %vm1078, 1, 0
  %v1095 = vcvt.s32.f32 %v1079
  %v1096 = vcvt.s32.f32 %v1080
  %v1097 = vcvt.s32.f32 %v1081
  %v1098 = vcvt.s32.f32 %v1082
  %v1099 = vcvt.s32.f32 %v1083
  %v1100 = vcvt.s32.f32 %v1084
  %v1101 = vcvt.s32.f32 %v1085
  %v1102 = vcvt.s32.f32 %v1086
  %v1103 = vcvt.s32.f32 %v1087
  %v1104 = vcvt.s32.f32 %v1088
  %v1105 = vcvt.s32.f32 %v1089
  %v1106 = vcvt.s32.f32 %v1090
  %v1107 = vcvt.s32.f32 %v1091
  %v1108 = vcvt.s32.f32 %v1092
  %v1109 = vcvt.s32.f32 %v1093
  %v1110 = vcvt.s32.f32 %v1094
  %v1111 = vpack.c.bf16 %v1096, %v1095
  %v1112 = vpack.c.bf16 %v1098, %v1097
  %v1113 = vpack.c.bf16 %v1100, %v1099
  %v1114 = vpack.c.bf16 %v1102, %v1101
  %v1115 = vpack.c.bf16 %v1104, %v1103
  %v1116 = vpack.c.bf16 %v1106, %v1105
  %v1117 = vpack.c.bf16 %v1108, %v1107
  %v1118 = vpack.c.bf16 %v1110, %v1109
  %v1119 = vlaneseq
  %v1120 = vshrl.u32 %v1119, 7
  %v1121 = vadd.s32 %v1120, 8
  %v1122 = vadd.s32 %v1120, 16
  %v1123 = vadd.s32 %v1120, 24
  %v1124 = vadd.s32 %v1120, 32
  %v1125 = vadd.s32 %v1120, 40
  %v1126 = vadd.s32 %v1120, 48
  %v1127 = vadd.s32 %v1120, 56
  %v1128 = vadd.s32 %v1120, 64
  %v1129 = vadd.s32 %v1120, 72
  %v1130 = vadd.s32 %v1120, 80
  %v1131 = vadd.s32 %v1120, 88
  %v1132 = vadd.s32 %v1120, 96
  %v1133 = vadd.s32 %v1120, 104
  %v1134 = vadd.s32 %v1120, 112
  %v1135 = vadd.s32 %v1120, 120
  %v1136 = vld [vmem:[%s3] sm:$0x1]
  %v1137 = vlaneseq
  %v1138 = vshrl.u32 %v1137, 7
  %v1139 = vsub.s32 0, %v1138
  %v1140 = vrot.slane %v1136, %v1139
  %vm1141 = vcmp.eq.s32.totalorder %v1120, %v1140
  %vm1142 = vcmp.eq.s32.totalorder %v1121, %v1140
  %vm1143 = vcmp.eq.s32.totalorder %v1122, %v1140
  %vm1144 = vcmp.eq.s32.totalorder %v1123, %v1140
  %vm1145 = vcmp.eq.s32.totalorder %v1124, %v1140
  %vm1146 = vcmp.eq.s32.totalorder %v1125, %v1140
  %vm1147 = vcmp.eq.s32.totalorder %v1126, %v1140
  %vm1148 = vcmp.eq.s32.totalorder %v1127, %v1140
  %vm1149 = vcmp.eq.s32.totalorder %v1128, %v1140
  %vm1150 = vcmp.eq.s32.totalorder %v1129, %v1140
  %vm1151 = vcmp.eq.s32.totalorder %v1130, %v1140
  %vm1152 = vcmp.eq.s32.totalorder %v1131, %v1140
  %vm1153 = vcmp.eq.s32.totalorder %v1132, %v1140
  %vm1154 = vcmp.eq.s32.totalorder %v1133, %v1140
  %vm1155 = vcmp.eq.s32.totalorder %v1134, %v1140
  %vm1156 = vcmp.eq.s32.totalorder %v1135, %v1140
  %v1157 = vsel %vm1141, 1, 0
  %v1158 = vsel %vm1142, 1, 0
  %v1159 = vsel %vm1143, 1, 0
  %v1160 = vsel %vm1144, 1, 0
  %v1161 = vsel %vm1145, 1, 0
  %v1162 = vsel %vm1146, 1, 0
  %v1163 = vsel %vm1147, 1, 0
  %v1164 = vsel %vm1148, 1, 0
  %v1165 = vsel %vm1149, 1, 0
  %v1166 = vsel %vm1150, 1, 0
  %v1167 = vsel %vm1151, 1, 0
  %v1168 = vsel %vm1152, 1, 0
  %v1169 = vsel %vm1153, 1, 0
  %v1170 = vsel %vm1154, 1, 0
  %v1171 = vsel %vm1155, 1, 0
  %v1172 = vsel %vm1156, 1, 0
  %v1173 = vcvt.s32.f32 %v1157
  %v1174 = vcvt.s32.f32 %v1158
  %v1175 = vcvt.s32.f32 %v1159
  %v1176 = vcvt.s32.f32 %v1160
  %v1177 = vcvt.s32.f32 %v1161
  %v1178 = vcvt.s32.f32 %v1162
  %v1179 = vcvt.s32.f32 %v1163
  %v1180 = vcvt.s32.f32 %v1164
  %v1181 = vcvt.s32.f32 %v1165
  %v1182 = vcvt.s32.f32 %v1166
  %v1183 = vcvt.s32.f32 %v1167
  %v1184 = vcvt.s32.f32 %v1168
  %v1185 = vcvt.s32.f32 %v1169
  %v1186 = vcvt.s32.f32 %v1170
  %v1187 = vcvt.s32.f32 %v1171
  %v1188 = vcvt.s32.f32 %v1172
  %v1189 = vpack.c.bf16 %v1174, %v1173
  %v1190 = vpack.c.bf16 %v1176, %v1175
  %v1191 = vpack.c.bf16 %v1178, %v1177
  %v1192 = vpack.c.bf16 %v1180, %v1179
  %v1193 = vpack.c.bf16 %v1182, %v1181
  %v1194 = vpack.c.bf16 %v1184, %v1183
  %v1195 = vpack.c.bf16 %v1186, %v1185
  %v1196 = vpack.c.bf16 %v1188, %v1187
  %v1197 = vld [vmem:[#allocation2] sm:$0xff]
  %v1198 = vld [vmem:[#allocation2 + $0x8] sm:$0xff]
  %v1199 = vld [vmem:[#allocation2 + $0x10] sm:$0xff]
  %v1200 = vld [vmem:[#allocation2 + $0x18] sm:$0xff]
  %v1201 = vld [vmem:[#allocation2 + $0x20] sm:$0xff]
  %v1202 = vld [vmem:[#allocation2 + $0x28] sm:$0xff]
  %v1203 = vld [vmem:[#allocation2 + $0x30] sm:$0xff]
  %v1204 = vld [vmem:[#allocation2 + $0x38] sm:$0xff]
  %v1205 = vld [vmem:[#allocation2 + $0x40] sm:$0xff]
  %v1206 = vld [vmem:[#allocation2 + $0x48] sm:$0xff]
  %v1207 = vld [vmem:[#allocation2 + $0x50] sm:$0xff]
  %v1208 = vld [vmem:[#allocation2 + $0x58] sm:$0xff]
  %v1209 = vld [vmem:[#allocation2 + $0x60] sm:$0xff]
  %v1210 = vld [vmem:[#allocation2 + $0x68] sm:$0xff]
  %v1211 = vld [vmem:[#allocation2 + $0x70] sm:$0xff]
  %v1212 = vld [vmem:[#allocation2 + $0x78] sm:$0xff]
  %1213 = vmatprep.subr.bf16.mxu0 %v1198
  %1214 = vmatpush1.bf16.msra.mxu0 %v1197
  %1215 = vmatprep.subr.bf16.mxu0 %v1200
  %1216 = vmatpush1.bf16.msra.mxu0 %v1199
  %1217 = vmatprep.subr.bf16.mxu0 %v1202
  %1218 = vmatpush1.bf16.msra.mxu0 %v1201
  %1219 = vmatprep.subr.bf16.mxu0 %v1204
  %1220 = vmatpush1.bf16.msra.mxu0 %v1203
  %1221 = vmatprep.subr.bf16.mxu0 %v1206
  %1222 = vmatpush1.bf16.msra.mxu0 %v1205
  %1223 = vmatprep.subr.bf16.mxu0 %v1208
  %1224 = vmatpush1.bf16.msra.mxu0 %v1207
  %1225 = vmatprep.subr.bf16.mxu0 %v1210
  %1226 = vmatpush1.bf16.msra.mxu0 %v1209
  %1227 = vmatprep.subr.bf16.mxu0 %v1212
  %1228 = vmatpush1.bf16.msra.mxu0 %v1211
  %1229 = vmatprep.subr.bf16.mxu0 0
  %1230 = vmatpush1.bf16.msra.mxu0 0
  %1231 = vmatprep.subr.bf16.mxu0 0
  %1232 = vmatpush1.bf16.msra.mxu0 0
  %1233 = vmatprep.subr.bf16.mxu0 0
  %1234 = vmatpush1.bf16.msra.mxu0 0
  %1235 = vmatprep.subr.bf16.mxu0 0
  %1236 = vmatpush1.bf16.msra.mxu0 0
  %1237 = vmatprep.subr.bf16.mxu0 0
  %1238 = vmatpush1.bf16.msra.mxu0 0
  %1239 = vmatprep.subr.bf16.mxu0 0
  %1240 = vmatpush1.bf16.msra.mxu0 0
  %1241 = vmatprep.subr.bf16.mxu0 0
  %1242 = vmatpush1.bf16.msra.mxu0 0
  %1243 = vmatprep.subr.bf16.mxu0 0
  %1244 = vmatpush1.bf16.msra.mxu0 0
  %1245 = vmatprep.mubr.bf16.mxu0 0
  %1246 = vmatmul.mubr.bf16.gmra.mrb[0].mxu0 %v1111
  %v1247 = vpop.f32.mrb[0].mxu0
  %v1248 = vadd.f32 0.0, %v1247
  %v1249 = vpop.f32.mrb[0].mxu0
  %v1250 = vadd.f32 0.0, %v1249
  %v1251 = vpop.f32.mrb[0].mxu0
  %v1252 = vadd.f32 0.0, %v1251
  %v1253 = vpop.f32.mrb[0].mxu0
  %v1254 = vadd.f32 0.0, %v1253
  %1255 = vmatprep.mubr.bf16.mxu0 0
  %1256 = vmatmul.mubr.bf16.gmra.mrb[0].mxu0 %v1112
  %v1257 = vpop.f32.mrb[0].mxu0
  %v1258 = vadd.f32 0.0, %v1257
  %v1259 = vpop.f32.mrb[0].mxu0
  %v1260 = vadd.f32 0.0, %v1259
  %v1261 = vpop.f32.mrb[0].mxu0
  %v1262 = vadd.f32 0.0, %v1261
  %v1263 = vpop.f32.mrb[0].mxu0
  %v1264 = vadd.f32 0.0, %v1263
  %1265 = vmatprep.mubr.bf16.mxu0 0
  %1266 = vmatmul.mubr.bf16.gmra.mrb[0].mxu0 %v1113
  %v1267 = vpop.f32.mrb[0].mxu0
  %v1268 = vadd.f32 0.0, %v1267
  %v1269 = vpop.f32.mrb[0].mxu0
  %v1270 = vadd.f32 0.0, %v1269
  %v1271 = vpop.f32.mrb[0].mxu0
  %v1272 = vadd.f32 0.0, %v1271
  %v1273 = vpop.f32.mrb[0].mxu0
  %v1274 = vadd.f32 0.0, %v1273
  %1275 = vmatprep.mubr.bf16.mxu0 0
  %1276 = vmatmul.mubr.bf16.gmra.mrb[0].mxu0 %v1114
  %v1277 = vpop.f32.mrb[0].mxu0
  %v1278 = vadd.f32 0.0, %v1277
  %v1279 = vpop.f32.mrb[0].mxu0
  %v1280 = vadd.f32 0.0, %v1279
  %v1281 = vpop.f32.mrb[0].mxu0
  %v1282 = vadd.f32 0.0, %v1281
  %v1283 = vpop.f32.mrb[0].mxu0
  %v1284 = vadd.f32 0.0, %v1283
  %1285 = vmatprep.mubr.bf16.mxu0 0
  %1286 = vmatmul.mubr.bf16.gmra.mrb[0].mxu0 %v1115
  %v1287 = vpop.f32.mrb[0].mxu0
  %v1288 = vadd.f32 0.0, %v1287
  %v1289 = vpop.f32.mrb[0].mxu0
  %v1290 = vadd.f32 0.0, %v1289
  %v1291 = vpop.f32.mrb[0].mxu0
  %v1292 = vadd.f32 0.0, %v1291
  %v1293 = vpop.f32.mrb[0].mxu0
  %v1294 = vadd.f32 0.0, %v1293
  %1295 = vmatprep.mubr.bf16.mxu0 0
  %1296 = vmatmul.mubr.bf16.gmra.mrb[0].mxu0 %v1116
  %v1297 = vpop.f32.mrb[0].mxu0
  %v1298 = vadd.f32 0.0, %v1297
  %v1299 = vpop.f32.mrb[0].mxu0
  %v1300 = vadd.f32 0.0, %v1299
  %v1301 = vpop.f32.mrb[0].mxu0
  %v1302 = vadd.f32 0.0, %v1301
  %v1303 = vpop.f32.mrb[0].mxu0
  %v1304 = vadd.f32 0.0, %v1303
  %1305 = vmatprep.mubr.bf16.mxu0 0
  %1306 = vmatmul.mubr.bf16.gmra.mrb[0].mxu0 %v1117
  %v1307 = vpop.f32.mrb[0].mxu0
  %v1308 = vadd.f32 0.0, %v1307
  %v1309 = vpop.f32.mrb[0].mxu0
  %v1310 = vadd.f32 0.0, %v1309
  %v1311 = vpop.f32.mrb[0].mxu0
  %v1312 = vadd.f32 0.0, %v1311
  %v1313 = vpop.f32.mrb[0].mxu0
  %v1314 = vadd.f32 0.0, %v1313
  %1315 = vmatprep.mubr.bf16.mxu0 0
  %1316 = vmatmul.mubr.bf16.gmra.mrb[0].mxu0 %v1118
  %v1317 = vpop.f32.mrb[0].mxu0
  %v1318 = vadd.f32 0.0, %v1317
  %v1319 = vpop.f32.mrb[0].mxu0
  %v1320 = vadd.f32 0.0, %v1319
  %v1321 = vpop.f32.mrb[0].mxu0
  %v1322 = vadd.f32 0.0, %v1321
  %v1323 = vpop.f32.mrb[0].mxu0
  %v1324 = vadd.f32 0.0, %v1323
  %1325 = vdwg.mxu0
  %v1326 = vld [vmem:[%s1] sm:$0xff]
  %v1327 = vld [vmem:[%s1 + $0x8] sm:$0xff]
  %v1328 = vld [vmem:[%s1 + $0x10] sm:$0xff]
  %v1329 = vld [vmem:[%s1 + $0x18] sm:$0xff]
  %v1330 = vld [vmem:[%s1 + $0x20] sm:$0xff]
  %v1331 = vld [vmem:[%s1 + $0x28] sm:$0xff]
  %v1332 = vld [vmem:[%s1 + $0x30] sm:$0xff]
  %v1333 = vld [vmem:[%s1 + $0x38] sm:$0xff]
  %v1334 = vld [vmem:[%s1 + $0x40] sm:$0xff]
  %v1335 = vld [vmem:[%s1 + $0x48] sm:$0xff]
  %v1336 = vld [vmem:[%s1 + $0x50] sm:$0xff]
  %v1337 = vld [vmem:[%s1 + $0x58] sm:$0xff]
  %v1338 = vld [vmem:[%s1 + $0x60] sm:$0xff]
  %v1339 = vld [vmem:[%s1 + $0x68] sm:$0xff]
  %v1340 = vld [vmem:[%s1 + $0x70] sm:$0xff]
  %v1341 = vld [vmem:[%s1 + $0x78] sm:$0xff]
  %v1342 = vunpack.c.l.bf16 %v1326
  %v1343 = vunpack.c.h.bf16 %v1326
  %v1344 = vunpack.c.l.bf16 %v1327
  %v1345 = vunpack.c.h.bf16 %v1327
  %v1346 = vunpack.c.l.bf16 %v1328
  %v1347 = vunpack.c.h.bf16 %v1328
  %v1348 = vunpack.c.l.bf16 %v1329
  %v1349 = vunpack.c.h.bf16 %v1329
  %v1350 = vunpack.c.l.bf16 %v1330
  %v1351 = vunpack.c.h.bf16 %v1330
  %v1352 = vunpack.c.l.bf16 %v1331
  %v1353 = vunpack.c.h.bf16 %v1331
  %v1354 = vunpack.c.l.bf16 %v1332
  %v1355 = vunpack.c.h.bf16 %v1332
  %v1356 = vunpack.c.l.bf16 %v1333
  %v1357 = vunpack.c.h.bf16 %v1333
  %v1358 = vunpack.c.l.bf16 %v1334
  %v1359 = vunpack.c.h.bf16 %v1334
  %v1360 = vunpack.c.l.bf16 %v1335
  %v1361 = vunpack.c.h.bf16 %v1335
  %v1362 = vunpack.c.l.bf16 %v1336
  %v1363 = vunpack.c.h.bf16 %v1336
  %v1364 = vunpack.c.l.bf16 %v1337
  %v1365 = vunpack.c.h.bf16 %v1337
  %v1366 = vunpack.c.l.bf16 %v1338
  %v1367 = vunpack.c.h.bf16 %v1338
  %v1368 = vunpack.c.l.bf16 %v1339
  %v1369 = vunpack.c.h.bf16 %v1339
  %v1370 = vunpack.c.l.bf16 %v1340
  %v1371 = vunpack.c.h.bf16 %v1340
  %v1372 = vunpack.c.l.bf16 %v1341
  %v1373 = vunpack.c.h.bf16 %v1341
  %v1374 = vmul.f32 %v1342, %v1248
  %v1375 = vmul.f32 %v1344, %v1252
  %v1376 = vmul.f32 %v1346, %v1258
  %v1377 = vmul.f32 %v1348, %v1262
  %v1378 = vmul.f32 %v1350, %v1268
  %v1379 = vmul.f32 %v1352, %v1272
  %v1380 = vmul.f32 %v1354, %v1278
  %v1381 = vmul.f32 %v1356, %v1282
  %v1382 = vmul.f32 %v1358, %v1288
  %v1383 = vmul.f32 %v1360, %v1292
  %v1384 = vmul.f32 %v1362, %v1298
  %v1385 = vmul.f32 %v1364, %v1302
  %v1386 = vmul.f32 %v1366, %v1308
  %v1387 = vmul.f32 %v1368, %v1312
  %v1388 = vmul.f32 %v1370, %v1318
  %v1389 = vmul.f32 %v1372, %v1322
  %v1390 = vmul.f32 %v1343, %v1250
  %v1391 = vmul.f32 %v1345, %v1254
  %v1392 = vmul.f32 %v1347, %v1260
  %v1393 = vmul.f32 %v1349, %v1264
  %v1394 = vmul.f32 %v1351, %v1270
  %v1395 = vmul.f32 %v1353, %v1274
  %v1396 = vmul.f32 %v1355, %v1280
  %v1397 = vmul.f32 %v1357, %v1284
  %v1398 = vmul.f32 %v1359, %v1290
  %v1399 = vmul.f32 %v1361, %v1294
  %v1400 = vmul.f32 %v1363, %v1300
  %v1401 = vmul.f32 %v1365, %v1304
  %v1402 = vmul.f32 %v1367, %v1310
  %v1403 = vmul.f32 %v1369, %v1314
  %v1404 = vmul.f32 %v1371, %v1320
  %v1405 = vmul.f32 %v1373, %v1324
  %v1406 = vadd.f32 %v1374, %v1390
  %v1407 = vadd.f32 %v1375, %v1391
  %v1408 = vadd.f32 %v1376, %v1392
  %v1409 = vadd.f32 %v1377, %v1393
  %v1410 = vadd.f32 %v1378, %v1394
  %v1411 = vadd.f32 %v1379, %v1395
  %v1412 = vadd.f32 %v1380, %v1396
  %v1413 = vadd.f32 %v1381, %v1397
  %v1414 = vadd.f32 %v1382, %v1398
  %v1415 = vadd.f32 %v1383, %v1399
  %v1416 = vadd.f32 %v1384, %v1400
  %v1417 = vadd.f32 %v1385, %v1401
  %v1418 = vadd.f32 %v1386, %v1402
  %v1419 = vadd.f32 %v1387, %v1403
  %v1420 = vadd.f32 %v1388, %v1404
  %v1421 = vadd.f32 %v1389, %v1405
  %v1422 = vpack.c.bf16 %v1407, %v1406
  %v1423 = vpack.c.bf16 %v1409, %v1408
  %v1424 = vpack.c.bf16 %v1411, %v1410
  %v1425 = vpack.c.bf16 %v1413, %v1412
  %v1426 = vpack.c.bf16 %v1415, %v1414
  %v1427 = vpack.c.bf16 %v1417, %v1416
  %v1428 = vpack.c.bf16 %v1419, %v1418
  %v1429 = vpack.c.bf16 %v1421, %v1420
  %v1430 = vld [vmem:[%s8] sm:$0xff]
  %v1431 = vld [vmem:[%s8 + $0x8] sm:$0xff]
  %v1432 = vld [vmem:[%s8 + $0x10] sm:$0xff]
  %v1433 = vld [vmem:[%s8 + $0x18] sm:$0xff]
  %v1434 = vld [vmem:[%s8 + $0x20] sm:$0xff]
  %v1435 = vld [vmem:[%s8 + $0x28] sm:$0xff]
  %v1436 = vld [vmem:[%s8 + $0x30] sm:$0xff]
  %v1437 = vld [vmem:[%s8 + $0x38] sm:$0xff]
  %v1438 = vld [vmem:[%s8 + $0x40] sm:$0xff]
  %v1439 = vld [vmem:[%s8 + $0x48] sm:$0xff]
  %v1440 = vld [vmem:[%s8 + $0x50] sm:$0xff]
  %v1441 = vld [vmem:[%s8 + $0x58] sm:$0xff]
  %v1442 = vld [vmem:[%s8 + $0x60] sm:$0xff]
  %v1443 = vld [vmem:[%s8 + $0x68] sm:$0xff]
  %v1444 = vld [vmem:[%s8 + $0x70] sm:$0xff]
  %v1445 = vld [vmem:[%s8 + $0x78] sm:$0xff]
  %1446 = vmatprep.subr.bf16.mxu0 0
  %1447 = vmatpush1.bf16.msra.mxu0 %v1422
  %1448 = vmatprep.subr.bf16.mxu0 0
  %1449 = vmatpush1.bf16.msra.mxu0 %v1423
  %1450 = vmatprep.subr.bf16.mxu0 0
  %1451 = vmatpush1.bf16.msra.mxu0 %v1424
  %1452 = vmatprep.subr.bf16.mxu0 0
  %1453 = vmatpush1.bf16.msra.mxu0 %v1425
  %1454 = vmatprep.subr.bf16.mxu0 0
  %1455 = vmatpush1.bf16.msra.mxu0 %v1426
  %1456 = vmatprep.subr.bf16.mxu0 0
  %1457 = vmatpush1.bf16.msra.mxu0 %v1427
  %1458 = vmatprep.subr.bf16.mxu0 0
  %1459 = vmatpush1.bf16.msra.mxu0 %v1428
  %1460 = vmatprep.subr.bf16.mxu0 0
  %1461 = vmatpush1.bf16.msra.mxu0 %v1429
  %1462 = vmatprep.subr.bf16.mxu0 0
  %1463 = vmatpush1.bf16.msra.mxu0 0
  %1464 = vmatprep.subr.bf16.mxu0 0
  %1465 = vmatpush1.bf16.msra.mxu0 0
  %1466 = vmatprep.subr.bf16.mxu0 0
  %1467 = vmatpush1.bf16.msra.mxu0 0
  %1468 = vmatprep.subr.bf16.mxu0 0
  %1469 = vmatpush1.bf16.msra.mxu0 0
  %1470 = vmatprep.subr.bf16.mxu0 0
  %1471 = vmatpush1.bf16.msra.mxu0 0
  %1472 = vmatprep.subr.bf16.mxu0 0
  %1473 = vmatpush1.bf16.msra.mxu0 0
  %1474 = vmatprep.subr.bf16.mxu0 0
  %1475 = vmatpush1.bf16.msra.mxu0 0
  %1476 = vmatprep.subr.bf16.mxu0 0
  %1477 = vmatpush1.bf16.msra.mxu0 0
  %1478 = vmatprep.mubr.bf16.mxu0 0
  %1479 = vmatmul.mubr.bf16.gmra.mrb[0].mxu0 %v1189
  %v1480 = vpop.f32.mrb[0].mxu0
  %v1481 = vadd.f32 0.0, %v1480
  %v1482 = vpop.f32.mrb[0].mxu0
  %v1483 = vpop.f32.mrb[0].mxu0
  %v1484 = vadd.f32 0.0, %v1483
  %v1485 = vpop.f32.mrb[0].mxu0
  %1486 = vmatprep.mubr.bf16.mxu0 0
  %1487 = vmatmul.mubr.bf16.gmra.mrb[0].mxu0 %v1190
  %v1488 = vpop.f32.mrb[0].mxu0
  %v1489 = vadd.f32 0.0, %v1488
  %v1490 = vpop.f32.mrb[0].mxu0
  %v1491 = vpop.f32.mrb[0].mxu0
  %v1492 = vadd.f32 0.0, %v1491
  %v1493 = vpop.f32.mrb[0].mxu0
  %1494 = vmatprep.mubr.bf16.mxu0 0
  %1495 = vmatmul.mubr.bf16.gmra.mrb[0].mxu0 %v1191
  %v1496 = vpop.f32.mrb[0].mxu0
  %v1497 = vadd.f32 0.0, %v1496
  %v1498 = vpop.f32.mrb[0].mxu0
  %v1499 = vpop.f32.mrb[0].mxu0
  %v1500 = vadd.f32 0.0, %v1499
  %v1501 = vpop.f32.mrb[0].mxu0
  %1502 = vmatprep.mubr.bf16.mxu0 0
  %1503 = vmatmul.mubr.bf16.gmra.mrb[0].mxu0 %v1192
  %v1504 = vpop.f32.mrb[0].mxu0
  %v1505 = vadd.f32 0.0, %v1504
  %v1506 = vpop.f32.mrb[0].mxu0
  %v1507 = vpop.f32.mrb[0].mxu0
  %v1508 = vadd.f32 0.0, %v1507
  %v1509 = vpop.f32.mrb[0].mxu0
  %1510 = vmatprep.mubr.bf16.mxu0 0
  %1511 = vmatmul.mubr.bf16.gmra.mrb[0].mxu0 %v1193
  %v1512 = vpop.f32.mrb[0].mxu0
  %v1513 = vadd.f32 0.0, %v1512
  %v1514 = vpop.f32.mrb[0].mxu0
  %v1515 = vpop.f32.mrb[0].mxu0
  %v1516 = vadd.f32 0.0, %v1515
  %v1517 = vpop.f32.mrb[0].mxu0
  %1518 = vmatprep.mubr.bf16.mxu0 0
  %1519 = vmatmul.mubr.bf16.gmra.mrb[0].mxu0 %v1194
  %v1520 = vpop.f32.mrb[0].mxu0
  %v1521 = vadd.f32 0.0, %v1520
  %v1522 = vpop.f32.mrb[0].mxu0
  %v1523 = vpop.f32.mrb[0].mxu0
  %v1524 = vadd.f32 0.0, %v1523
  %v1525 = vpop.f32.mrb[0].mxu0
  %1526 = vmatprep.mubr.bf16.mxu0 0
  %1527 = vmatmul.mubr.bf16.gmra.mrb[0].mxu0 %v1195
  %v1528 = vpop.f32.mrb[0].mxu0
  %v1529 = vadd.f32 0.0, %v1528
  %v1530 = vpop.f32.mrb[0].mxu0
  %v1531 = vpop.f32.mrb[0].mxu0
  %v1532 = vadd.f32 0.0, %v1531
  %v1533 = vpop.f32.mrb[0].mxu0
  %1534 = vmatprep.mubr.bf16.mxu0 0
  %1535 = vmatmul.mubr.bf16.gmra.mrb[0].mxu0 %v1196
  %v1536 = vpop.f32.mrb[0].mxu0
  %v1537 = vadd.f32 0.0, %v1536
  %v1538 = vpop.f32.mrb[0].mxu0
  %v1539 = vpop.f32.mrb[0].mxu0
  %v1540 = vadd.f32 0.0, %v1539
  %v1541 = vpop.f32.mrb[0].mxu0
  %1542 = vdwg.mxu0
  %v1543 = vadd.f32 %v1430, %v1481
  %v1544 = vadd.f32 %v1431, %v1484
  %v1545 = vadd.f32 %v1432, %v1489
  %v1546 = vadd.f32 %v1433, %v1492
  %v1547 = vadd.f32 %v1434, %v1497
  %v1548 = vadd.f32 %v1435, %v1500
  %v1549 = vadd.f32 %v1436, %v1505
  %v1550 = vadd.f32 %v1437, %v1508
  %v1551 = vadd.f32 %v1438, %v1513
  %v1552 = vadd.f32 %v1439, %v1516
  %v1553 = vadd.f32 %v1440, %v1521
  %v1554 = vadd.f32 %v1441, %v1524
  %v1555 = vadd.f32 %v1442, %v1529
  %v1556 = vadd.f32 %v1443, %v1532
  %v1557 = vadd.f32 %v1444, %v1537
  %v1558 = vadd.f32 %v1445, %v1540
  %1559 = vst [vmem:[%s8] sm:$0xff] %v1543
  %1560 = vst [vmem:[%s8 + $0x8] sm:$0xff] %v1544
  %1561 = vst [vmem:[%s8 + $0x10] sm:$0xff] %v1545
  %1562 = vst [vmem:[%s8 + $0x18] sm:$0xff] %v1546
  %1563 = vst [vmem:[%s8 + $0x20] sm:$0xff] %v1547
  %1564 = vst [vmem:[%s8 + $0x28] sm:$0xff] %v1548
  %1565 = vst [vmem:[%s8 + $0x30] sm:$0xff] %v1549
  %1566 = vst [vmem:[%s8 + $0x38] sm:$0xff] %v1550
  %1567 = vst [vmem:[%s8 + $0x40] sm:$0xff] %v1551
  %1568 = vst [vmem:[%s8 + $0x48] sm:$0xff] %v1552
  %1569 = vst [vmem:[%s8 + $0x50] sm:$0xff] %v1553
  %1570 = vst [vmem:[%s8 + $0x58] sm:$0xff] %v1554
  %1571 = vst [vmem:[%s8 + $0x60] sm:$0xff] %v1555
  %1572 = vst [vmem:[%s8 + $0x68] sm:$0xff] %v1556
  %1573 = vst [vmem:[%s8 + $0x70] sm:$0xff] %v1557
  %1574 = vst [vmem:[%s8 + $0x78] sm:$0xff] %v1558
  // Predicated region
  $region38: #{painn_interaction.1} parent=0 // pred_check
    _
  $region39: #{painn_interaction.1} parent=0 // pred_check_branch
    %1576 = sbr.rel (0) target = $region41
  $region40: #{painn_interaction.1} parent=0 // pred_region
    _
  $region41: #{painn_interaction.1} parent=0 // pred_fallthru
    _
  // Predicated region
  $region42: #{painn_interaction.1} parent=0 // pred_check
    _
  $region43: #{painn_interaction.1} parent=0 // pred_check_branch
    %1578 = sbr.rel (0) target = $region45
  $region44: #{painn_interaction.1} parent=0 // pred_region
    _
  $region45: #{painn_interaction.1} parent=0 // pred_fallthru
    _

</llo_original>
